<compile_context>
chip_gen: v6e
topology: v6e:2x2x1
jax: 0.10.0
libtpu: 0.0.40
codegen_flags: <defaults>
</compile_context>

<pallas_src>
import functools

import jax
import jax.numpy as jnp
from jax.experimental import pallas as pl
from jax.experimental.pallas import tpu as pltpu

LN_EPS = 1e-12     # BERT layer_norm_eps
ROW_TILE = 256     # target row tile for mem-bound linears / LN


# ----------------------------------------------------------------------------
# Small helpers
# ----------------------------------------------------------------------------
def _round_up(x, m):
    return ((x + m - 1) // m) * m


def _pad_rows(x, m_pad):
    M = x.shape[0]
    if M == m_pad:
        return x
    return jnp.pad(x, ((0, m_pad - M), (0, 0)))


def _row_tiling(M):
    tm = min(ROW_TILE, _round_up(M, 8))
    m_pad = _round_up(M, tm)
    return tm, m_pad


def _col_tile(N):
    # Tile output columns of large (FFN) weights so each weight block stays a
    # few MiB (fits v5e's 16 MiB default scoped VMEM / v7x's 64 MiB physical).
    if N >= 1024 and N % 128 == 0:
        tn = 512
        while N % tn != 0:
            tn //= 2
        return max(tn, 128)
    return N


def _gelu_tanh(x):
    # tanh approximation of GELU (EUP tanh, ~1e-3 deviation from exact erf-GELU)
    c = 0.7978845608028654  # sqrt(2/pi)
    return 0.5 * x * (1.0 + jnp.tanh(c * (x + 0.044715 * x * x * x)))


# ----------------------------------------------------------------------------
# Linear (optionally fused activation), bf16 MXU, f32 accumulate
# ----------------------------------------------------------------------------
def _linear_kernel(x_ref, w_ref, b_ref, o_ref, *, activation):
    x = x_ref[...].astype(jnp.bfloat16)
    y = jnp.dot(x, w_ref[...], preferred_element_type=jnp.float32)
    y = y + b_ref[...]
    if activation == "gelu":
        y = _gelu_tanh(y)
    elif activation == "tanh":
        y = jnp.tanh(y)
    o_ref[...] = y.astype(o_ref.dtype)


def linear(x, w, b, activation=None):
    """y = act(x @ w + b). x:(M,K) f32, w:(K,N) bf16, b:(N,) f32."""
    M, K = x.shape
    K2, N = w.shape
    assert K == K2
    tm, m_pad = _row_tiling(M)
    tn = _col_tile(N)
    xp = _pad_rows(x, m_pad)
    grid = (m_pad // tm, N // tn)
    kernel = functools.partial(_linear_kernel, activation=activation)
    out = pl.pallas_call(
        kernel,
        out_shape=jax.ShapeDtypeStruct((m_pad, N), jnp.float32),
        grid=grid,
        in_specs=[
            pl.BlockSpec((tm, K), lambda i, j: (i, 0)),
            pl.BlockSpec((K, tn), lambda i, j: (0, j)),
            pl.BlockSpec((1, tn), lambda i, j: (0, j)),
        ],
        out_specs=pl.BlockSpec((tm, tn), lambda i, j: (i, j)),
        compiler_params=pltpu.CompilerParams(
            dimension_semantics=("parallel", "parallel")),
    )(xp, w, b.reshape(1, N))
    return out[:M] if m_pad != M else out


# ----------------------------------------------------------------------------
# Linear + residual add + LayerNorm (fused)
# ----------------------------------------------------------------------------
def _linear_ln_kernel(x_ref, w_ref, b_ref, r_ref, g_ref, beta_ref, o_ref):
    x = x_ref[...].astype(jnp.bfloat16)
    y = jnp.dot(x, w_ref[...], preferred_element_type=jnp.float32)
    y = y + b_ref[...] + r_ref[...].astype(jnp.float32)
    mu = jnp.mean(y, axis=-1, keepdims=True)
    var = jnp.mean(jnp.square(y - mu), axis=-1, keepdims=True)
    yn = (y - mu) * jax.lax.rsqrt(var + LN_EPS)
    o_ref[...] = (yn * g_ref[...] + beta_ref[...]).astype(o_ref.dtype)


def linear_ln(x, w, b, residual, gamma, beta):
    """LayerNorm(x @ w + b + residual). LN reduces over full N, so no N tiling."""
    M, K = x.shape
    _, N = w.shape
    tm, m_pad = _row_tiling(M)
    xp = _pad_rows(x, m_pad)
    rp = _pad_rows(residual, m_pad)
    grid = (m_pad // tm,)
    out = pl.pallas_call(
        _linear_ln_kernel,
        out_shape=jax.ShapeDtypeStruct((m_pad, N), jnp.float32),
        grid=grid,
        in_specs=[
            pl.BlockSpec((tm, K), lambda i: (i, 0)),
            pl.BlockSpec((K, N), lambda i: (0, 0)),
            pl.BlockSpec((1, N), lambda i: (0, 0)),
            pl.BlockSpec((tm, N), lambda i: (i, 0)),
            pl.BlockSpec((1, N), lambda i: (0, 0)),
            pl.BlockSpec((1, N), lambda i: (0, 0)),
        ],
        out_specs=pl.BlockSpec((tm, N), lambda i: (i, 0)),
        compiler_params=pltpu.CompilerParams(dimension_semantics=("parallel",)),
    )(xp, w, b.reshape(1, N), rp, gamma.reshape(1, N), beta.reshape(1, N))
    return out[:M] if m_pad != M else out


# ----------------------------------------------------------------------------
# Standalone LayerNorm (embedding output)
# ----------------------------------------------------------------------------
def _ln_kernel(x_ref, g_ref, b_ref, o_ref):
    x = x_ref[...].astype(jnp.float32)
    mu = jnp.mean(x, axis=-1, keepdims=True)
    var = jnp.mean(jnp.square(x - mu), axis=-1, keepdims=True)
    y = (x - mu) * jax.lax.rsqrt(var + LN_EPS)
    o_ref[...] = (y * g_ref[...] + b_ref[...]).astype(o_ref.dtype)


def layernorm(x, g, b):
    M, H = x.shape
    tm, m_pad = _row_tiling(M)
    xp = _pad_rows(x, m_pad)
    grid = (m_pad // tm,)
    out = pl.pallas_call(
        _ln_kernel,
        out_shape=jax.ShapeDtypeStruct((m_pad, H), jnp.float32),
        grid=grid,
        in_specs=[
            pl.BlockSpec((tm, H), lambda i: (i, 0)),
            pl.BlockSpec((1, H), lambda i: (0, 0)),
            pl.BlockSpec((1, H), lambda i: (0, 0)),
        ],
        out_specs=pl.BlockSpec((tm, H), lambda i: (i, 0)),
        compiler_params=pltpu.CompilerParams(dimension_semantics=("parallel",)),
    )(xp, g.reshape(1, H), b.reshape(1, H))
    return out[:M] if m_pad != M else out


# ----------------------------------------------------------------------------
# Fused-QKV multi-head attention: one batch element per grid step, all heads
# processed in-kernel by static column slices; lane-dense (S, H) output.
# ----------------------------------------------------------------------------
def _attn_kernel(qkv_ref, o_ref, *, num_heads, head_dim, scale):
    H = num_heads * head_dim
    qkv = qkv_ref[0]                       # (S, 3H) f32
    outs = []
    for h in range(num_heads):
        lo, hi = h * head_dim, (h + 1) * head_dim
        q = qkv[:, lo:hi].astype(jnp.bfloat16)
        k = qkv[:, H + lo:H + hi]          # keep f32 for the transpose
        v = qkv[:, 2 * H + lo:2 * H + hi].astype(jnp.bfloat16)
        s = jnp.dot(q, k.T.astype(jnp.bfloat16),
                    preferred_element_type=jnp.float32) * scale
        m = jnp.max(s, axis=-1, keepdims=True)
        p = jnp.exp(s - m)
        p = p * pl.reciprocal(jnp.sum(p, axis=-1, keepdims=True), approx=True)
        outs.append(jnp.dot(p.astype(jnp.bfloat16), v,
                            preferred_element_type=jnp.float32))
    o_ref[0] = jnp.concatenate(outs, axis=-1).astype(o_ref.dtype)


def attention(qkv, num_heads, head_dim):
    """qkv: (B, S, 3H) fused projections -> (B, S, H) context."""
    B, S, H3 = qkv.shape
    H = num_heads * head_dim
    assert H3 == 3 * H
    scale = 1.0 / (head_dim ** 0.5)
    kernel = functools.partial(_attn_kernel, num_heads=num_heads,
                               head_dim=head_dim, scale=scale)
    return pl.pallas_call(
        kernel,
        out_shape=jax.ShapeDtypeStruct((B, S, H), jnp.float32),
        grid=(B,),
        in_specs=[pl.BlockSpec((1, S, H3), lambda i: (i, 0, 0))],
        out_specs=pl.BlockSpec((1, S, H), lambda i: (i, 0, 0)),
        compiler_params=pltpu.CompilerParams(dimension_semantics=("parallel",)),
    )(qkv)


# ----------------------------------------------------------------------------
# Softmax cross-entropy (mean reduction); labels live in SMEM
# ----------------------------------------------------------------------------
def _ce_kernel(logits_ref, labels_ref, loss_ref):
    logits = logits_ref[...].astype(jnp.float32)              # (B, C)
    B, C = logits.shape
    m = jnp.max(logits, axis=-1, keepdims=True)
    lse = jnp.log(jnp.sum(jnp.exp(logits - m), axis=-1, keepdims=True)) + m
    classes = jax.lax.broadcasted_iota(jnp.int32, (1, C), 1)
    total = jnp.float32(0.0)
    for b in range(B):                                        # B is small/static
        lbl = labels_ref[b]                                   # scalar from SMEM
        onehot = (classes == lbl).astype(jnp.float32)         # (1, C)
        total = total + jnp.sum((lse[b:b + 1, :] - logits[b:b + 1, :]) * onehot)
    loss_ref[...] = jnp.reshape(total / jnp.float32(B), (1, 1))


def cross_entropy(logits, labels):
    """nn.CrossEntropyLoss (mean). logits:(B,C), labels:(B,) int."""
    B, C = logits.shape
    loss = pl.pallas_call(
        _ce_kernel,
        out_shape=jax.ShapeDtypeStruct((1, 1), jnp.float32),
        grid=(1,),
        in_specs=[
            pl.BlockSpec((B, C), lambda i: (0, 0)),
            pl.BlockSpec(memory_space=pltpu.MemorySpace.SMEM),
        ],
        out_specs=pl.BlockSpec((1, 1), lambda i: (0, 0)),
    )(logits, labels.astype(jnp.int32))
    return loss[0, 0]


# ----------------------------------------------------------------------------
# Model: small-config BERT encoder + pooler + classifier + CE loss
# ----------------------------------------------------------------------------
def init_params(key, cfg):
    H, I, L = cfg["hidden"], cfg["intermediate"], cfg["layers"]
    V, P, T, C = cfg["vocab"], cfg["max_pos"], cfg["type_vocab"], cfg["num_labels"]
    keys = iter(jax.random.split(key, 16 + L * 8))

    def w(shape, dtype=jnp.bfloat16):
        return (0.02 * jax.random.normal(next(keys), shape)).astype(dtype)

    zeros = lambda n: jnp.zeros((n,), jnp.float32)
    ones = lambda n: jnp.ones((n,), jnp.float32)

    params = dict(
        word_emb=w((V, H), jnp.float32),
        pos_emb=w((P, H), jnp.float32),
        type_emb=w((T, H), jnp.float32),
        emb_ln_g=ones(H), emb_ln_b=zeros(H),
        wp=w((H, H)), bp=zeros(H),          # pooler
        wc=w((H, C)), bc=zeros(C),          # classifier
        layers=[],
    )
    for _ in range(L):
        params["layers"].append(dict(
            wqkv=w((H, 3 * H)), bqkv=zeros(3 * H),    # fused Q|K|V projection
            wo=w((H, H)), bo=zeros(H),
            ln1_g=ones(H), ln1_b=zeros(H),
            wi=w((H, I)), bi=zeros(I),
            wo2=w((I, H)), bo2=zeros(H),
            ln2_g=ones(H), ln2_b=zeros(H),
        ))
    return params


def bert_forward(params, input_ids, labels, cfg):
    B, S = input_ids.shape
    H, nh = cfg["hidden"], cfg["heads"]
    dh = H // nh

    # --- embeddings: word + position + token_type (plain-JAX gathers), LN ---
    emb = (params["word_emb"][input_ids]
           + params["pos_emb"][jnp.arange(S)][None, :, :]
           + params["type_emb"][0][None, None, :])           # token_type_ids = 0
    x = emb.reshape(B * S, H).astype(jnp.float32)
    x = layernorm(x, params["emb_ln_g"], params["emb_ln_b"])

    # --- encoder layers ---
    for layer in params["layers"]:
        qkv = linear(x, layer["wqkv"], layer["bqkv"])         # (B*S, 3H)
        ctx = attention(qkv.reshape(B, S, 3 * H), nh, dh).reshape(B * S, H)
        x = linear_ln(ctx, layer["wo"], layer["bo"], x,
                      layer["ln1_g"], layer["ln1_b"])         # attn out + LN1

        inter = linear(x, layer["wi"], layer["bi"], activation="gelu")
        x = linear_ln(inter, layer["wo2"], layer["bo2"], x,
                      layer["ln2_g"], layer["ln2_b"])         # ffn out + LN2

    # --- pooler (tanh on [CLS]) + classifier + cross-entropy loss ---
    cls = x.reshape(B, S, H)[:, 0, :]
    pooled = linear(cls, params["wp"], params["bp"], activation="tanh")
    logits = linear(pooled, params["wc"], params["bc"])
    loss = cross_entropy(logits, labels)
    return loss, logits


# ----------------------------------------------------------------------------
# Driver
# ----------------------------------------------------------------------------
if __name__ == "__main__":
    cfg = dict(vocab=100, hidden=32, heads=4, intermediate=64, layers=2,
               max_pos=16, type_vocab=2, num_labels=2)
    B, S = 2, 8

    key = jax.random.PRNGKey(0)
    pkey, ikey, lkey = jax.random.split(key, 3)
    params = init_params(pkey, cfg)
    input_ids = jax.random.randint(ikey, (B, S), 0, cfg["vocab"], dtype=jnp.int32)
    labels = jax.random.randint(lkey, (B,), 0, cfg["num_labels"], dtype=jnp.int32)

    fwd = jax.jit(functools.partial(bert_forward, cfg=cfg))
    loss, logits = fwd(params, input_ids, labels)
    jax.block_until_ready((loss, logits))

    assert logits.shape == (B, cfg["num_labels"])
    assert loss.shape == ()
    assert bool(jnp.isfinite(loss)) and bool(jnp.all(jnp.isfinite(logits)))
    print("KERNEL_OK")
</pallas_src>

<mosaic_0001>
module attributes {stable_mosaic.version = 11 : i64} {
  func.func @_linear_ln_kernel(%arg0: i32, %arg1: memref<16x32xf32, #tpu.memory_space<vmem>>, %arg2: memref<32x32xbf16, #tpu.memory_space<vmem>>, %arg3: memref<1x32xf32, #tpu.memory_space<vmem>>, %arg4: memref<16x32xf32, #tpu.memory_space<vmem>>, %arg5: memref<1x32xf32, #tpu.memory_space<vmem>>, %arg6: memref<1x32xf32, #tpu.memory_space<vmem>>, %arg7: memref<16x32xf32, #tpu.memory_space<vmem>>) attributes {dimension_semantics = [#tpu.dimension_semantics<parallel>], iteration_bounds = array<i64: 1>, scalar_prefetch = 0 : i64, scratch_operands = 0 : i64, tpu.core_type = #tpu.core_type<tc>, window_params = [{transform_indices = @transform_0, window_bounds = array<i64: 16, 32>}, {pipeline_mode = #tpu.pipeline_mode<synchronous>, transform_indices = @transform_1, window_bounds = array<i64: 32, 32>}, {pipeline_mode = #tpu.pipeline_mode<synchronous>, transform_indices = @transform_2, window_bounds = array<i64: 1, 32>}, {transform_indices = @transform_3, window_bounds = array<i64: 16, 32>}, {pipeline_mode = #tpu.pipeline_mode<synchronous>, transform_indices = @transform_4, window_bounds = array<i64: 1, 32>}, {pipeline_mode = #tpu.pipeline_mode<synchronous>, transform_indices = @transform_5, window_bounds = array<i64: 1, 32>}, {transform_indices = @transform_6, window_bounds = array<i64: 16, 32>}]} {
    %c0 = arith.constant 0 : index
    %c0_0 = arith.constant 0 : index
    %0 = vector.load %arg1[%c0, %c0_0] : memref<16x32xf32, #tpu.memory_space<vmem>>, vector<16x32xf32>
    %1 = arith.truncf %0 : vector<16x32xf32> to vector<16x32xbf16>
    %c0_1 = arith.constant 0 : index
    %c0_2 = arith.constant 0 : index
    %2 = vector.load %arg2[%c0_1, %c0_2] : memref<32x32xbf16, #tpu.memory_space<vmem>>, vector<32x32xbf16>
    %cst = arith.constant dense<0.000000e+00> : vector<16x32xf32>
    %3 = tpu.matmul %1, %2, %cst {dimension_numbers = #tpu.dot_dimension_numbers<[1], [0], [0], [1], [0, 0, 1, 1], [], []>} : vector<16x32xbf16>, vector<32x32xbf16>, vector<16x32xf32> -> vector<16x32xf32>
    %c0_3 = arith.constant 0 : index
    %c0_4 = arith.constant 0 : index
    %4 = vector.load %arg3[%c0_3, %c0_4] : memref<1x32xf32, #tpu.memory_space<vmem>>, vector<1x32xf32>
    %5 = vector.broadcast %4 : vector<1x32xf32> to vector<16x32xf32>
    %6 = arith.addf %3, %5 : vector<16x32xf32>
    %c0_5 = arith.constant 0 : index
    %c0_6 = arith.constant 0 : index
    %7 = vector.load %arg4[%c0_5, %c0_6] : memref<16x32xf32, #tpu.memory_space<vmem>>, vector<16x32xf32>
    %8 = arith.addf %6, %7 : vector<16x32xf32>
    %cst_7 = arith.constant dense<0.000000e+00> : vector<16xf32>
    %9 = vector.multi_reduction <add>, %8, %cst_7 [1] : vector<16x32xf32> to vector<16xf32>
    %10 = vector.shape_cast %9 : vector<16xf32> to vector<16x1xf32>
    %cst_8 = arith.constant 3.200000e+01 : f32
    %11 = vector.broadcast %cst_8 : f32 to vector<16x1xf32>
    %12 = arith.divf %10, %11 : vector<16x1xf32>
    %13 = vector.broadcast %12 : vector<16x1xf32> to vector<16x32xf32>
    %14 = arith.subf %8, %13 : vector<16x32xf32>
    %15 = arith.mulf %14, %14 : vector<16x32xf32>
    %cst_9 = arith.constant dense<0.000000e+00> : vector<16xf32>
    %16 = vector.multi_reduction <add>, %15, %cst_9 [1] : vector<16x32xf32> to vector<16xf32>
    %17 = vector.shape_cast %16 : vector<16xf32> to vector<16x1xf32>
    %cst_10 = arith.constant 3.200000e+01 : f32
    %18 = vector.broadcast %cst_10 : f32 to vector<16x1xf32>
    %19 = arith.divf %17, %18 : vector<16x1xf32>
    %20 = vector.broadcast %12 : vector<16x1xf32> to vector<16x32xf32>
    %21 = arith.subf %8, %20 : vector<16x32xf32>
    %cst_11 = arith.constant 9.99999996E-13 : f32
    %22 = vector.broadcast %cst_11 : f32 to vector<16x1xf32>
    %23 = arith.addf %19, %22 : vector<16x1xf32>
    %24 = math.rsqrt %23 : vector<16x1xf32>
    %25 = vector.broadcast %24 : vector<16x1xf32> to vector<16x32xf32>
    %26 = arith.mulf %21, %25 : vector<16x32xf32>
    %c0_12 = arith.constant 0 : index
    %c0_13 = arith.constant 0 : index
    %27 = vector.load %arg5[%c0_12, %c0_13] : memref<1x32xf32, #tpu.memory_space<vmem>>, vector<1x32xf32>
    %28 = vector.broadcast %27 : vector<1x32xf32> to vector<16x32xf32>
    %29 = arith.mulf %26, %28 : vector<16x32xf32>
    %c0_14 = arith.constant 0 : index
    %c0_15 = arith.constant 0 : index
    %30 = vector.load %arg6[%c0_14, %c0_15] : memref<1x32xf32, #tpu.memory_space<vmem>>, vector<1x32xf32>
    %31 = vector.broadcast %30 : vector<1x32xf32> to vector<16x32xf32>
    %32 = arith.addf %29, %31 : vector<16x32xf32>
    %c0_16 = arith.constant 0 : index
    %c0_17 = arith.constant 0 : index
    %33 = vector.load %arg7[%c0_16, %c0_17] : memref<16x32xf32, #tpu.memory_space<vmem>>, vector<16x32xf32>
    tpu.vector_store %arg7[%c0_16, %c0_17], %32 {strides = array<i32>} : memref<16x32xf32, #tpu.memory_space<vmem>>, vector<16x32xf32>,
    return
  }
  func.func @transform_0(%arg0: i32) -> (i32, i32) {
    %c0_i32 = arith.constant 0 : i32
    %c0_i32_0 = arith.constant 0 : i32
    return %arg0, %c0_i32 : i32, i32
  }
  func.func @transform_1(%arg0: i32) -> (i32, i32) {
    %c0_i32 = arith.constant 0 : i32
    %c0_i32_0 = arith.constant 0 : i32
    %c0_i32_1 = arith.constant 0 : i32
    return %c0_i32, %c0_i32_0 : i32, i32
  }
  func.func @transform_2(%arg0: i32) -> (i32, i32) {
    %c0_i32 = arith.constant 0 : i32
    %c0_i32_0 = arith.constant 0 : i32
    %c0_i32_1 = arith.constant 0 : i32
    return %c0_i32, %c0_i32_0 : i32, i32
  }
  func.func @transform_3(%arg0: i32) -> (i32, i32) {
    %c0_i32 = arith.constant 0 : i32
    %c0_i32_0 = arith.constant 0 : i32
    return %arg0, %c0_i32 : i32, i32
  }
  func.func @transform_4(%arg0: i32) -> (i32, i32) {
    %c0_i32 = arith.constant 0 : i32
    %c0_i32_0 = arith.constant 0 : i32
    %c0_i32_1 = arith.constant 0 : i32
    return %c0_i32, %c0_i32_0 : i32, i32
  }
  func.func @transform_5(%arg0: i32) -> (i32, i32) {
    %c0_i32 = arith.constant 0 : i32
    %c0_i32_0 = arith.constant 0 : i32
    %c0_i32_1 = arith.constant 0 : i32
    return %c0_i32, %c0_i32_0 : i32, i32
  }
  func.func @transform_6(%arg0: i32) -> (i32, i32) {
    %c0_i32 = arith.constant 0 : i32
    %c0_i32_0 = arith.constant 0 : i32
    return %arg0, %c0_i32 : i32, i32
  }
}

module attributes {stable_mosaic.version = 11 : i64} {
  func.func @_attn_kernel(%arg0: i32, %arg1: memref<1x8x96xf32, #tpu.memory_space<vmem>>, %arg2: memref<1x8x32xf32, #tpu.memory_space<vmem>>) attributes {dimension_semantics = [#tpu.dimension_semantics<parallel>], iteration_bounds = array<i64: 2>, scalar_prefetch = 0 : i64, scratch_operands = 0 : i64, tpu.core_type = #tpu.core_type<tc>, window_params = [{transform_indices = @transform_0, window_bounds = array<i64: 1, 8, 96>}, {transform_indices = @transform_1, window_bounds = array<i64: 1, 8, 32>}]} {
    %c0 = arith.constant 0 : index
    %c0_0 = arith.constant 0 : index
    %c0_1 = arith.constant 0 : index
    %0 = vector.load %arg1[%c0, %c0_0, %c0_1] : memref<1x8x96xf32, #tpu.memory_space<vmem>>, vector<1x8x96xf32>
    %1 = vector.shape_cast %0 : vector<1x8x96xf32> to vector<8x96xf32>
    %2 = vector.extract_strided_slice %1 {offsets = [0, 0], sizes = [8, 8], strides = [1, 1]} : vector<8x96xf32> to vector<8x8xf32>
    %3 = arith.truncf %2 : vector<8x8xf32> to vector<8x8xbf16>
    %4 = vector.extract_strided_slice %1 {offsets = [0, 32], sizes = [8, 8], strides = [1, 1]} : vector<8x96xf32> to vector<8x8xf32>
    %5 = vector.extract_strided_slice %1 {offsets = [0, 64], sizes = [8, 8], strides = [1, 1]} : vector<8x96xf32> to vector<8x8xf32>
    %6 = arith.truncf %5 : vector<8x8xf32> to vector<8x8xbf16>
    %7 = tpu.transpose %4, [1, 0] : vector<8x8xf32> -> vector<8x8xf32>
    %8 = arith.truncf %7 : vector<8x8xf32> to vector<8x8xbf16>
    %cst = arith.constant dense<0.000000e+00> : vector<8x8xf32>
    %9 = tpu.matmul %3, %8, %cst {dimension_numbers = #tpu.dot_dimension_numbers<[1], [0], [0], [1], [0, 0, 1, 1], [], []>} : vector<8x8xbf16>, vector<8x8xbf16>, vector<8x8xf32> -> vector<8x8xf32>
    %cst_2 = arith.constant 0.353553385 : f32
    %10 = vector.broadcast %cst_2 : f32 to vector<8x8xf32>
    %11 = arith.mulf %9, %10 : vector<8x8xf32>
    %cst_3 = arith.constant dense<0xFF800000> : vector<8xf32>
    %12 = vector.multi_reduction <maximumf>, %11, %cst_3 [1] : vector<8x8xf32> to vector<8xf32>
    %13 = vector.shape_cast %12 : vector<8xf32> to vector<8x1xf32>
    %14 = vector.broadcast %13 : vector<8x1xf32> to vector<8x8xf32>
    %15 = arith.subf %11, %14 : vector<8x8xf32>
    %16 = math.exp %15 : vector<8x8xf32>
    %cst_4 = arith.constant dense<0.000000e+00> : vector<8xf32>
    %17 = vector.multi_reduction <add>, %16, %cst_4 [1] : vector<8x8xf32> to vector<8xf32>
    %18 = vector.shape_cast %17 : vector<8xf32> to vector<8x1xf32>
    %19 = tpu.reciprocal %18 {approx = true} : vector<8x1xf32> -> vector<8x1xf32>
    %20 = vector.broadcast %19 : vector<8x1xf32> to vector<8x8xf32>
    %21 = arith.mulf %16, %20 : vector<8x8xf32>
    %22 = arith.truncf %21 : vector<8x8xf32> to vector<8x8xbf16>
    %cst_5 = arith.constant dense<0.000000e+00> : vector<8x8xf32>
    %23 = tpu.matmul %22, %6, %cst_5 {dimension_numbers = #tpu.dot_dimension_numbers<[1], [0], [0], [1], [0, 0, 1, 1], [], []>} : vector<8x8xbf16>, vector<8x8xbf16>, vector<8x8xf32> -> vector<8x8xf32>
    %24 = vector.extract_strided_slice %1 {offsets = [0, 8], sizes = [8, 8], strides = [1, 1]} : vector<8x96xf32> to vector<8x8xf32>
    %25 = arith.truncf %24 : vector<8x8xf32> to vector<8x8xbf16>
    %26 = vector.extract_strided_slice %1 {offsets = [0, 40], sizes = [8, 8], strides = [1, 1]} : vector<8x96xf32> to vector<8x8xf32>
    %27 = vector.extract_strided_slice %1 {offsets = [0, 72], sizes = [8, 8], strides = [1, 1]} : vector<8x96xf32> to vector<8x8xf32>
    %28 = arith.truncf %27 : vector<8x8xf32> to vector<8x8xbf16>
    %29 = tpu.transpose %26, [1, 0] : vector<8x8xf32> -> vector<8x8xf32>
    %30 = arith.truncf %29 : vector<8x8xf32> to vector<8x8xbf16>
    %cst_6 = arith.constant dense<0.000000e+00> : vector<8x8xf32>
    %31 = tpu.matmul %25, %30, %cst_6 {dimension_numbers = #tpu.dot_dimension_numbers<[1], [0], [0], [1], [0, 0, 1, 1], [], []>} : vector<8x8xbf16>, vector<8x8xbf16>, vector<8x8xf32> -> vector<8x8xf32>
    %cst_7 = arith.constant 0.353553385 : f32
    %32 = vector.broadcast %cst_7 : f32 to vector<8x8xf32>
    %33 = arith.mulf %31, %32 : vector<8x8xf32>
    %cst_8 = arith.constant dense<0xFF800000> : vector<8xf32>
    %34 = vector.multi_reduction <maximumf>, %33, %cst_8 [1] : vector<8x8xf32> to vector<8xf32>
    %35 = vector.shape_cast %34 : vector<8xf32> to vector<8x1xf32>
    %36 = vector.broadcast %35 : vector<8x1xf32> to vector<8x8xf32>
    %37 = arith.subf %33, %36 : vector<8x8xf32>
    %38 = math.exp %37 : vector<8x8xf32>
    %cst_9 = arith.constant dense<0.000000e+00> : vector<8xf32>
    %39 = vector.multi_reduction <add>, %38, %cst_9 [1] : vector<8x8xf32> to vector<8xf32>
    %40 = vector.shape_cast %39 : vector<8xf32> to vector<8x1xf32>
    %41 = tpu.reciprocal %40 {approx = true} : vector<8x1xf32> -> vector<8x1xf32>
    %42 = vector.broadcast %41 : vector<8x1xf32> to vector<8x8xf32>
    %43 = arith.mulf %38, %42 : vector<8x8xf32>
    %44 = arith.truncf %43 : vector<8x8xf32> to vector<8x8xbf16>
    %cst_10 = arith.constant dense<0.000000e+00> : vector<8x8xf32>
    %45 = tpu.matmul %44, %28, %cst_10 {dimension_numbers = #tpu.dot_dimension_numbers<[1], [0], [0], [1], [0, 0, 1, 1], [], []>} : vector<8x8xbf16>, vector<8x8xbf16>, vector<8x8xf32> -> vector<8x8xf32>
    %46 = vector.extract_strided_slice %1 {offsets = [0, 16], sizes = [8, 8], strides = [1, 1]} : vector<8x96xf32> to vector<8x8xf32>
    %47 = arith.truncf %46 : vector<8x8xf32> to vector<8x8xbf16>
    %48 = vector.extract_strided_slice %1 {offsets = [0, 48], sizes = [8, 8], strides = [1, 1]} : vector<8x96xf32> to vector<8x8xf32>
    %49 = vector.extract_strided_slice %1 {offsets = [0, 80], sizes = [8, 8], strides = [1, 1]} : vector<8x96xf32> to vector<8x8xf32>
    %50 = arith.truncf %49 : vector<8x8xf32> to vector<8x8xbf16>
    %51 = tpu.transpose %48, [1, 0] : vector<8x8xf32> -> vector<8x8xf32>
    %52 = arith.truncf %51 : vector<8x8xf32> to vector<8x8xbf16>
    %cst_11 = arith.constant dense<0.000000e+00> : vector<8x8xf32>
    %53 = tpu.matmul %47, %52, %cst_11 {dimension_numbers = #tpu.dot_dimension_numbers<[1], [0], [0], [1], [0, 0, 1, 1], [], []>} : vector<8x8xbf16>, vector<8x8xbf16>, vector<8x8xf32> -> vector<8x8xf32>
    %cst_12 = arith.constant 0.353553385 : f32
    %54 = vector.broadcast %cst_12 : f32 to vector<8x8xf32>
    %55 = arith.mulf %53, %54 : vector<8x8xf32>
    %cst_13 = arith.constant dense<0xFF800000> : vector<8xf32>
    %56 = vector.multi_reduction <maximumf>, %55, %cst_13 [1] : vector<8x8xf32> to vector<8xf32>
    %57 = vector.shape_cast %56 : vector<8xf32> to vector<8x1xf32>
    %58 = vector.broadcast %57 : vector<8x1xf32> to vector<8x8xf32>
    %59 = arith.subf %55, %58 : vector<8x8xf32>
    %60 = math.exp %59 : vector<8x8xf32>
    %cst_14 = arith.constant dense<0.000000e+00> : vector<8xf32>
    %61 = vector.multi_reduction <add>, %60, %cst_14 [1] : vector<8x8xf32> to vector<8xf32>
    %62 = vector.shape_cast %61 : vector<8xf32> to vector<8x1xf32>
    %63 = tpu.reciprocal %62 {approx = true} : vector<8x1xf32> -> vector<8x1xf32>
    %64 = vector.broadcast %63 : vector<8x1xf32> to vector<8x8xf32>
    %65 = arith.mulf %60, %64 : vector<8x8xf32>
    %66 = arith.truncf %65 : vector<8x8xf32> to vector<8x8xbf16>
    %cst_15 = arith.constant dense<0.000000e+00> : vector<8x8xf32>
    %67 = tpu.matmul %66, %50, %cst_15 {dimension_numbers = #tpu.dot_dimension_numbers<[1], [0], [0], [1], [0, 0, 1, 1], [], []>} : vector<8x8xbf16>, vector<8x8xbf16>, vector<8x8xf32> -> vector<8x8xf32>
    %68 = vector.extract_strided_slice %1 {offsets = [0, 24], sizes = [8, 8], strides = [1, 1]} : vector<8x96xf32> to vector<8x8xf32>
    %69 = arith.truncf %68 : vector<8x8xf32> to vector<8x8xbf16>
    %70 = vector.extract_strided_slice %1 {offsets = [0, 56], sizes = [8, 8], strides = [1, 1]} : vector<8x96xf32> to vector<8x8xf32>
    %71 = vector.extract_strided_slice %1 {offsets = [0, 88], sizes = [8, 8], strides = [1, 1]} : vector<8x96xf32> to vector<8x8xf32>
    %72 = arith.truncf %71 : vector<8x8xf32> to vector<8x8xbf16>
    %73 = tpu.transpose %70, [1, 0] : vector<8x8xf32> -> vector<8x8xf32>
    %74 = arith.truncf %73 : vector<8x8xf32> to vector<8x8xbf16>
    %cst_16 = arith.constant dense<0.000000e+00> : vector<8x8xf32>
    %75 = tpu.matmul %69, %74, %cst_16 {dimension_numbers = #tpu.dot_dimension_numbers<[1], [0], [0], [1], [0, 0, 1, 1], [], []>} : vector<8x8xbf16>, vector<8x8xbf16>, vector<8x8xf32> -> vector<8x8xf32>
    %cst_17 = arith.constant 0.353553385 : f32
    %76 = vector.broadcast %cst_17 : f32 to vector<8x8xf32>
    %77 = arith.mulf %75, %76 : vector<8x8xf32>
    %cst_18 = arith.constant dense<0xFF800000> : vector<8xf32>
    %78 = vector.multi_reduction <maximumf>, %77, %cst_18 [1] : vector<8x8xf32> to vector<8xf32>
    %79 = vector.shape_cast %78 : vector<8xf32> to vector<8x1xf32>
    %80 = vector.broadcast %79 : vector<8x1xf32> to vector<8x8xf32>
    %81 = arith.subf %77, %80 : vector<8x8xf32>
    %82 = math.exp %81 : vector<8x8xf32>
    %cst_19 = arith.constant dense<0.000000e+00> : vector<8xf32>
    %83 = vector.multi_reduction <add>, %82, %cst_19 [1] : vector<8x8xf32> to vector<8xf32>
    %84 = vector.shape_cast %83 : vector<8xf32> to vector<8x1xf32>
    %85 = tpu.reciprocal %84 {approx = true} : vector<8x1xf32> -> vector<8x1xf32>
    %86 = vector.broadcast %85 : vector<8x1xf32> to vector<8x8xf32>
    %87 = arith.mulf %82, %86 : vector<8x8xf32>
    %88 = arith.truncf %87 : vector<8x8xf32> to vector<8x8xbf16>
    %cst_20 = arith.constant dense<0.000000e+00> : vector<8x8xf32>
    %89 = tpu.matmul %88, %72, %cst_20 {dimension_numbers = #tpu.dot_dimension_numbers<[1], [0], [0], [1], [0, 0, 1, 1], [], []>} : vector<8x8xbf16>, vector<8x8xbf16>, vector<8x8xf32> -> vector<8x8xf32>
    %90 = tpu.concatenate %23, %45, %67, %89 in 1 : vector<8x8xf32>, vector<8x8xf32>, vector<8x8xf32>, vector<8x8xf32> -> vector<8x32xf32>
    %c0_21 = arith.constant 0 : index
    %c0_22 = arith.constant 0 : index
    %c0_23 = arith.constant 0 : index
    %91 = vector.load %arg2[%c0_21, %c0_22, %c0_23] : memref<1x8x32xf32, #tpu.memory_space<vmem>>, vector<1x8x32xf32>
    %92 = vector.shape_cast %91 : vector<1x8x32xf32> to vector<8x32xf32>
    %93 = vector.shape_cast %90 : vector<8x32xf32> to vector<1x8x32xf32>
    tpu.vector_store %arg2[%c0_21, %c0_22, %c0_23], %93 {strides = array<i32>} : memref<1x8x32xf32, #tpu.memory_space<vmem>>, vector<1x8x32xf32>,
    return
  }
  func.func @transform_0(%arg0: i32) -> (i32, i32, i32) {
    %c0_i32 = arith.constant 0 : i32
    %c0_i32_0 = arith.constant 0 : i32
    %c0_i32_1 = arith.constant 0 : i32
    return %arg0, %c0_i32, %c0_i32_0 : i32, i32, i32
  }
  func.func @transform_1(%arg0: i32) -> (i32, i32, i32) {
    %c0_i32 = arith.constant 0 : i32
    %c0_i32_0 = arith.constant 0 : i32
    %c0_i32_1 = arith.constant 0 : i32
    return %arg0, %c0_i32, %c0_i32_0 : i32, i32, i32
  }
}

module attributes {stable_mosaic.version = 11 : i64} {
  func.func @_linear_kernel(%arg0: i32, %arg1: i32, %arg2: memref<16x32xf32, #tpu.memory_space<vmem>>, %arg3: memref<32x96xbf16, #tpu.memory_space<vmem>>, %arg4: memref<1x96xf32, #tpu.memory_space<vmem>>, %arg5: memref<16x96xf32, #tpu.memory_space<vmem>>) attributes {dimension_semantics = [#tpu.dimension_semantics<parallel>, #tpu.dimension_semantics<parallel>], iteration_bounds = array<i64: 1, 1>, scalar_prefetch = 0 : i64, scratch_operands = 0 : i64, tpu.core_type = #tpu.core_type<tc>, window_params = [{transform_indices = @transform_0, window_bounds = array<i64: 16, 32>}, {transform_indices = @transform_1, window_bounds = array<i64: 32, 96>}, {transform_indices = @transform_2, window_bounds = array<i64: 1, 96>}, {transform_indices = @transform_3, window_bounds = array<i64: 16, 96>}]} {
    %c0 = arith.constant 0 : index
    %c0_0 = arith.constant 0 : index
    %0 = vector.load %arg2[%c0, %c0_0] : memref<16x32xf32, #tpu.memory_space<vmem>>, vector<16x32xf32>
    %1 = arith.truncf %0 : vector<16x32xf32> to vector<16x32xbf16>
    %c0_1 = arith.constant 0 : index
    %c0_2 = arith.constant 0 : index
    %2 = vector.load %arg3[%c0_1, %c0_2] : memref<32x96xbf16, #tpu.memory_space<vmem>>, vector<32x96xbf16>
    %cst = arith.constant dense<0.000000e+00> : vector<16x96xf32>
    %3 = tpu.matmul %1, %2, %cst {dimension_numbers = #tpu.dot_dimension_numbers<[1], [0], [0], [1], [0, 0, 1, 1], [], []>} : vector<16x32xbf16>, vector<32x96xbf16>, vector<16x96xf32> -> vector<16x96xf32>
    %c0_3 = arith.constant 0 : index
    %c0_4 = arith.constant 0 : index
    %4 = vector.load %arg4[%c0_3, %c0_4] : memref<1x96xf32, #tpu.memory_space<vmem>>, vector<1x96xf32>
    %5 = vector.broadcast %4 : vector<1x96xf32> to vector<16x96xf32>
    %6 = arith.addf %3, %5 : vector<16x96xf32>
    %c0_5 = arith.constant 0 : index
    %c0_6 = arith.constant 0 : index
    %7 = vector.load %arg5[%c0_5, %c0_6] : memref<16x96xf32, #tpu.memory_space<vmem>>, vector<16x96xf32>
    tpu.vector_store %arg5[%c0_5, %c0_6], %6 {strides = array<i32>} : memref<16x96xf32, #tpu.memory_space<vmem>>, vector<16x96xf32>,
    return
  }
  func.func @transform_0(%arg0: i32, %arg1: i32) -> (i32, i32) {
    %c0_i32 = arith.constant 0 : i32
    %c0_i32_0 = arith.constant 0 : i32
    return %arg0, %c0_i32 : i32, i32
  }
  func.func @transform_1(%arg0: i32, %arg1: i32) -> (i32, i32) {
    %c0_i32 = arith.constant 0 : i32
    %c0_i32_0 = arith.constant 0 : i32
    return %c0_i32, %arg1 : i32, i32
  }
  func.func @transform_2(%arg0: i32, %arg1: i32) -> (i32, i32) {
    %c0_i32 = arith.constant 0 : i32
    %c0_i32_0 = arith.constant 0 : i32
    return %c0_i32, %arg1 : i32, i32
  }
  func.func @transform_3(%arg0: i32, %arg1: i32) -> (i32, i32) {
    %c0_i32 = arith.constant 0 : i32
    return %arg0, %arg1 : i32, i32
  }
}

module attributes {stable_mosaic.version = 11 : i64} {
  func.func @_ln_kernel(%arg0: i32, %arg1: memref<16x32xf32, #tpu.memory_space<vmem>>, %arg2: memref<1x32xf32, #tpu.memory_space<vmem>>, %arg3: memref<1x32xf32, #tpu.memory_space<vmem>>, %arg4: memref<16x32xf32, #tpu.memory_space<vmem>>) attributes {dimension_semantics = [#tpu.dimension_semantics<parallel>], iteration_bounds = array<i64: 1>, scalar_prefetch = 0 : i64, scratch_operands = 0 : i64, tpu.core_type = #tpu.core_type<tc>, window_params = [{transform_indices = @transform_0, window_bounds = array<i64: 16, 32>}, {pipeline_mode = #tpu.pipeline_mode<synchronous>, transform_indices = @transform_1, window_bounds = array<i64: 1, 32>}, {pipeline_mode = #tpu.pipeline_mode<synchronous>, transform_indices = @transform_2, window_bounds = array<i64: 1, 32>}, {transform_indices = @transform_3, window_bounds = array<i64: 16, 32>}]} {
    %c0 = arith.constant 0 : index
    %c0_0 = arith.constant 0 : index
    %0 = vector.load %arg1[%c0, %c0_0] : memref<16x32xf32, #tpu.memory_space<vmem>>, vector<16x32xf32>
    %cst = arith.constant dense<0.000000e+00> : vector<16xf32>
    %1 = vector.multi_reduction <add>, %0, %cst [1] : vector<16x32xf32> to vector<16xf32>
    %2 = vector.shape_cast %1 : vector<16xf32> to vector<16x1xf32>
    %cst_1 = arith.constant 3.200000e+01 : f32
    %3 = vector.broadcast %cst_1 : f32 to vector<16x1xf32>
    %4 = arith.divf %2, %3 : vector<16x1xf32>
    %5 = vector.broadcast %4 : vector<16x1xf32> to vector<16x32xf32>
    %6 = arith.subf %0, %5 : vector<16x32xf32>
    %7 = arith.mulf %6, %6 : vector<16x32xf32>
    %cst_2 = arith.constant dense<0.000000e+00> : vector<16xf32>
    %8 = vector.multi_reduction <add>, %7, %cst_2 [1] : vector<16x32xf32> to vector<16xf32>
    %9 = vector.shape_cast %8 : vector<16xf32> to vector<16x1xf32>
    %cst_3 = arith.constant 3.200000e+01 : f32
    %10 = vector.broadcast %cst_3 : f32 to vector<16x1xf32>
    %11 = arith.divf %9, %10 : vector<16x1xf32>
    %12 = vector.broadcast %4 : vector<16x1xf32> to vector<16x32xf32>
    %13 = arith.subf %0, %12 : vector<16x32xf32>
    %cst_4 = arith.constant 9.99999996E-13 : f32
    %14 = vector.broadcast %cst_4 : f32 to vector<16x1xf32>
    %15 = arith.addf %11, %14 : vector<16x1xf32>
    %16 = math.rsqrt %15 : vector<16x1xf32>
    %17 = vector.broadcast %16 : vector<16x1xf32> to vector<16x32xf32>
    %18 = arith.mulf %13, %17 : vector<16x32xf32>
    %c0_5 = arith.constant 0 : index
    %c0_6 = arith.constant 0 : index
    %19 = vector.load %arg2[%c0_5, %c0_6] : memref<1x32xf32, #tpu.memory_space<vmem>>, vector<1x32xf32>
    %20 = vector.broadcast %19 : vector<1x32xf32> to vector<16x32xf32>
    %21 = arith.mulf %18, %20 : vector<16x32xf32>
    %c0_7 = arith.constant 0 : index
    %c0_8 = arith.constant 0 : index
    %22 = vector.load %arg3[%c0_7, %c0_8] : memref<1x32xf32, #tpu.memory_space<vmem>>, vector<1x32xf32>
    %23 = vector.broadcast %22 : vector<1x32xf32> to vector<16x32xf32>
    %24 = arith.addf %21, %23 : vector<16x32xf32>
    %c0_9 = arith.constant 0 : index
    %c0_10 = arith.constant 0 : index
    %25 = vector.load %arg4[%c0_9, %c0_10] : memref<16x32xf32, #tpu.memory_space<vmem>>, vector<16x32xf32>
    tpu.vector_store %arg4[%c0_9, %c0_10], %24 {strides = array<i32>} : memref<16x32xf32, #tpu.memory_space<vmem>>, vector<16x32xf32>,
    return
  }
  func.func @transform_0(%arg0: i32) -> (i32, i32) {
    %c0_i32 = arith.constant 0 : i32
    %c0_i32_0 = arith.constant 0 : i32
    return %arg0, %c0_i32 : i32, i32
  }
  func.func @transform_1(%arg0: i32) -> (i32, i32) {
    %c0_i32 = arith.constant 0 : i32
    %c0_i32_0 = arith.constant 0 : i32
    %c0_i32_1 = arith.constant 0 : i32
    return %c0_i32, %c0_i32_0 : i32, i32
  }
  func.func @transform_2(%arg0: i32) -> (i32, i32) {
    %c0_i32 = arith.constant 0 : i32
    %c0_i32_0 = arith.constant 0 : i32
    %c0_i32_1 = arith.constant 0 : i32
    return %c0_i32, %c0_i32_0 : i32, i32
  }
  func.func @transform_3(%arg0: i32) -> (i32, i32) {
    %c0_i32 = arith.constant 0 : i32
    %c0_i32_0 = arith.constant 0 : i32
    return %arg0, %c0_i32 : i32, i32
  }
}

module attributes {stable_mosaic.version = 11 : i64} {
  func.func @_linear_ln_kernel(%arg0: i32, %arg1: memref<16x64xf32, #tpu.memory_space<vmem>>, %arg2: memref<64x32xbf16, #tpu.memory_space<vmem>>, %arg3: memref<1x32xf32, #tpu.memory_space<vmem>>, %arg4: memref<16x32xf32, #tpu.memory_space<vmem>>, %arg5: memref<1x32xf32, #tpu.memory_space<vmem>>, %arg6: memref<1x32xf32, #tpu.memory_space<vmem>>, %arg7: memref<16x32xf32, #tpu.memory_space<vmem>>) attributes {dimension_semantics = [#tpu.dimension_semantics<parallel>], iteration_bounds = array<i64: 1>, scalar_prefetch = 0 : i64, scratch_operands = 0 : i64, tpu.core_type = #tpu.core_type<tc>, window_params = [{transform_indices = @transform_0, window_bounds = array<i64: 16, 64>}, {pipeline_mode = #tpu.pipeline_mode<synchronous>, transform_indices = @transform_1, window_bounds = array<i64: 64, 32>}, {pipeline_mode = #tpu.pipeline_mode<synchronous>, transform_indices = @transform_2, window_bounds = array<i64: 1, 32>}, {transform_indices = @transform_3, window_bounds = array<i64: 16, 32>}, {pipeline_mode = #tpu.pipeline_mode<synchronous>, transform_indices = @transform_4, window_bounds = array<i64: 1, 32>}, {pipeline_mode = #tpu.pipeline_mode<synchronous>, transform_indices = @transform_5, window_bounds = array<i64: 1, 32>}, {transform_indices = @transform_6, window_bounds = array<i64: 16, 32>}]} {
    %c0 = arith.constant 0 : index
    %c0_0 = arith.constant 0 : index
    %0 = vector.load %arg1[%c0, %c0_0] : memref<16x64xf32, #tpu.memory_space<vmem>>, vector<16x64xf32>
    %1 = arith.truncf %0 : vector<16x64xf32> to vector<16x64xbf16>
    %c0_1 = arith.constant 0 : index
    %c0_2 = arith.constant 0 : index
    %2 = vector.load %arg2[%c0_1, %c0_2] : memref<64x32xbf16, #tpu.memory_space<vmem>>, vector<64x32xbf16>
    %cst = arith.constant dense<0.000000e+00> : vector<16x32xf32>
    %3 = tpu.matmul %1, %2, %cst {dimension_numbers = #tpu.dot_dimension_numbers<[1], [0], [0], [1], [0, 0, 1, 1], [], []>} : vector<16x64xbf16>, vector<64x32xbf16>, vector<16x32xf32> -> vector<16x32xf32>
    %c0_3 = arith.constant 0 : index
    %c0_4 = arith.constant 0 : index
    %4 = vector.load %arg3[%c0_3, %c0_4] : memref<1x32xf32, #tpu.memory_space<vmem>>, vector<1x32xf32>
    %5 = vector.broadcast %4 : vector<1x32xf32> to vector<16x32xf32>
    %6 = arith.addf %3, %5 : vector<16x32xf32>
    %c0_5 = arith.constant 0 : index
    %c0_6 = arith.constant 0 : index
    %7 = vector.load %arg4[%c0_5, %c0_6] : memref<16x32xf32, #tpu.memory_space<vmem>>, vector<16x32xf32>
    %8 = arith.addf %6, %7 : vector<16x32xf32>
    %cst_7 = arith.constant dense<0.000000e+00> : vector<16xf32>
    %9 = vector.multi_reduction <add>, %8, %cst_7 [1] : vector<16x32xf32> to vector<16xf32>
    %10 = vector.shape_cast %9 : vector<16xf32> to vector<16x1xf32>
    %cst_8 = arith.constant 3.200000e+01 : f32
    %11 = vector.broadcast %cst_8 : f32 to vector<16x1xf32>
    %12 = arith.divf %10, %11 : vector<16x1xf32>
    %13 = vector.broadcast %12 : vector<16x1xf32> to vector<16x32xf32>
    %14 = arith.subf %8, %13 : vector<16x32xf32>
    %15 = arith.mulf %14, %14 : vector<16x32xf32>
    %cst_9 = arith.constant dense<0.000000e+00> : vector<16xf32>
    %16 = vector.multi_reduction <add>, %15, %cst_9 [1] : vector<16x32xf32> to vector<16xf32>
    %17 = vector.shape_cast %16 : vector<16xf32> to vector<16x1xf32>
    %cst_10 = arith.constant 3.200000e+01 : f32
    %18 = vector.broadcast %cst_10 : f32 to vector<16x1xf32>
    %19 = arith.divf %17, %18 : vector<16x1xf32>
    %20 = vector.broadcast %12 : vector<16x1xf32> to vector<16x32xf32>
    %21 = arith.subf %8, %20 : vector<16x32xf32>
    %cst_11 = arith.constant 9.99999996E-13 : f32
    %22 = vector.broadcast %cst_11 : f32 to vector<16x1xf32>
    %23 = arith.addf %19, %22 : vector<16x1xf32>
    %24 = math.rsqrt %23 : vector<16x1xf32>
    %25 = vector.broadcast %24 : vector<16x1xf32> to vector<16x32xf32>
    %26 = arith.mulf %21, %25 : vector<16x32xf32>
    %c0_12 = arith.constant 0 : index
    %c0_13 = arith.constant 0 : index
    %27 = vector.load %arg5[%c0_12, %c0_13] : memref<1x32xf32, #tpu.memory_space<vmem>>, vector<1x32xf32>
    %28 = vector.broadcast %27 : vector<1x32xf32> to vector<16x32xf32>
    %29 = arith.mulf %26, %28 : vector<16x32xf32>
    %c0_14 = arith.constant 0 : index
    %c0_15 = arith.constant 0 : index
    %30 = vector.load %arg6[%c0_14, %c0_15] : memref<1x32xf32, #tpu.memory_space<vmem>>, vector<1x32xf32>
    %31 = vector.broadcast %30 : vector<1x32xf32> to vector<16x32xf32>
    %32 = arith.addf %29, %31 : vector<16x32xf32>
    %c0_16 = arith.constant 0 : index
    %c0_17 = arith.constant 0 : index
    %33 = vector.load %arg7[%c0_16, %c0_17] : memref<16x32xf32, #tpu.memory_space<vmem>>, vector<16x32xf32>
    tpu.vector_store %arg7[%c0_16, %c0_17], %32 {strides = array<i32>} : memref<16x32xf32, #tpu.memory_space<vmem>>, vector<16x32xf32>,
    return
  }
  func.func @transform_0(%arg0: i32) -> (i32, i32) {
    %c0_i32 = arith.constant 0 : i32
    %c0_i32_0 = arith.constant 0 : i32
    return %arg0, %c0_i32 : i32, i32
  }
  func.func @transform_1(%arg0: i32) -> (i32, i32) {
    %c0_i32 = arith.constant 0 : i32
    %c0_i32_0 = arith.constant 0 : i32
    %c0_i32_1 = arith.constant 0 : i32
    return %c0_i32, %c0_i32_0 : i32, i32
  }
  func.func @transform_2(%arg0: i32) -> (i32, i32) {
    %c0_i32 = arith.constant 0 : i32
    %c0_i32_0 = arith.constant 0 : i32
    %c0_i32_1 = arith.constant 0 : i32
    return %c0_i32, %c0_i32_0 : i32, i32
  }
  func.func @transform_3(%arg0: i32) -> (i32, i32) {
    %c0_i32 = arith.constant 0 : i32
    %c0_i32_0 = arith.constant 0 : i32
    return %arg0, %c0_i32 : i32, i32
  }
  func.func @transform_4(%arg0: i32) -> (i32, i32) {
    %c0_i32 = arith.constant 0 : i32
    %c0_i32_0 = arith.constant 0 : i32
    %c0_i32_1 = arith.constant 0 : i32
    return %c0_i32, %c0_i32_0 : i32, i32
  }
  func.func @transform_5(%arg0: i32) -> (i32, i32) {
    %c0_i32 = arith.constant 0 : i32
    %c0_i32_0 = arith.constant 0 : i32
    %c0_i32_1 = arith.constant 0 : i32
    return %c0_i32, %c0_i32_0 : i32, i32
  }
  func.func @transform_6(%arg0: i32) -> (i32, i32) {
    %c0_i32 = arith.constant 0 : i32
    %c0_i32_0 = arith.constant 0 : i32
    return %arg0, %c0_i32 : i32, i32
  }
}

module attributes {stable_mosaic.version = 11 : i64} {
  func.func @_linear_kernel(%arg0: i32, %arg1: i32, %arg2: memref<16x32xf32, #tpu.memory_space<vmem>>, %arg3: memref<32x64xbf16, #tpu.memory_space<vmem>>, %arg4: memref<1x64xf32, #tpu.memory_space<vmem>>, %arg5: memref<16x64xf32, #tpu.memory_space<vmem>>) attributes {dimension_semantics = [#tpu.dimension_semantics<parallel>, #tpu.dimension_semantics<parallel>], iteration_bounds = array<i64: 1, 1>, scalar_prefetch = 0 : i64, scratch_operands = 0 : i64, tpu.core_type = #tpu.core_type<tc>, window_params = [{transform_indices = @transform_0, window_bounds = array<i64: 16, 32>}, {transform_indices = @transform_1, window_bounds = array<i64: 32, 64>}, {transform_indices = @transform_2, window_bounds = array<i64: 1, 64>}, {transform_indices = @transform_3, window_bounds = array<i64: 16, 64>}]} {
    %c0 = arith.constant 0 : index
    %c0_0 = arith.constant 0 : index
    %0 = vector.load %arg2[%c0, %c0_0] : memref<16x32xf32, #tpu.memory_space<vmem>>, vector<16x32xf32>
    %1 = arith.truncf %0 : vector<16x32xf32> to vector<16x32xbf16>
    %c0_1 = arith.constant 0 : index
    %c0_2 = arith.constant 0 : index
    %2 = vector.load %arg3[%c0_1, %c0_2] : memref<32x64xbf16, #tpu.memory_space<vmem>>, vector<32x64xbf16>
    %cst = arith.constant dense<0.000000e+00> : vector<16x64xf32>
    %3 = tpu.matmul %1, %2, %cst {dimension_numbers = #tpu.dot_dimension_numbers<[1], [0], [0], [1], [0, 0, 1, 1], [], []>} : vector<16x32xbf16>, vector<32x64xbf16>, vector<16x64xf32> -> vector<16x64xf32>
    %c0_3 = arith.constant 0 : index
    %c0_4 = arith.constant 0 : index
    %4 = vector.load %arg4[%c0_3, %c0_4] : memref<1x64xf32, #tpu.memory_space<vmem>>, vector<1x64xf32>
    %5 = vector.broadcast %4 : vector<1x64xf32> to vector<16x64xf32>
    %6 = arith.addf %3, %5 : vector<16x64xf32>
    %cst_5 = arith.constant 5.000000e-01 : f32
    %7 = vector.broadcast %cst_5 : f32 to vector<16x64xf32>
    %8 = arith.mulf %7, %6 : vector<16x64xf32>
    %cst_6 = arith.constant 4.471500e-02 : f32
    %9 = vector.broadcast %cst_6 : f32 to vector<16x64xf32>
    %10 = arith.mulf %9, %6 : vector<16x64xf32>
    %11 = arith.mulf %10, %6 : vector<16x64xf32>
    %12 = arith.mulf %11, %6 : vector<16x64xf32>
    %13 = arith.addf %6, %12 : vector<16x64xf32>
    %cst_7 = arith.constant 0.797884583 : f32
    %14 = vector.broadcast %cst_7 : f32 to vector<16x64xf32>
    %15 = arith.mulf %14, %13 : vector<16x64xf32>
    %16 = math.tanh %15 : vector<16x64xf32>
    %cst_8 = arith.constant 1.000000e+00 : f32
    %17 = vector.broadcast %cst_8 : f32 to vector<16x64xf32>
    %18 = arith.addf %17, %16 : vector<16x64xf32>
    %19 = arith.mulf %8, %18 : vector<16x64xf32>
    %c0_9 = arith.constant 0 : index
    %c0_10 = arith.constant 0 : index
    %20 = vector.load %arg5[%c0_9, %c0_10] : memref<16x64xf32, #tpu.memory_space<vmem>>, vector<16x64xf32>
    tpu.vector_store %arg5[%c0_9, %c0_10], %19 {strides = array<i32>} : memref<16x64xf32, #tpu.memory_space<vmem>>, vector<16x64xf32>,
    return
  }
  func.func @transform_0(%arg0: i32, %arg1: i32) -> (i32, i32) {
    %c0_i32 = arith.constant 0 : i32
    %c0_i32_0 = arith.constant 0 : i32
    return %arg0, %c0_i32 : i32, i32
  }
  func.func @transform_1(%arg0: i32, %arg1: i32) -> (i32, i32) {
    %c0_i32 = arith.constant 0 : i32
    %c0_i32_0 = arith.constant 0 : i32
    return %c0_i32, %arg1 : i32, i32
  }
  func.func @transform_2(%arg0: i32, %arg1: i32) -> (i32, i32) {
    %c0_i32 = arith.constant 0 : i32
    %c0_i32_0 = arith.constant 0 : i32
    return %c0_i32, %arg1 : i32, i32
  }
  func.func @transform_3(%arg0: i32, %arg1: i32) -> (i32, i32) {
    %c0_i32 = arith.constant 0 : i32
    return %arg0, %arg1 : i32, i32
  }
}

module attributes {stable_mosaic.version = 11 : i64} {
  func.func @_linear_kernel(%arg0: i32, %arg1: i32, %arg2: memref<8x32xf32, #tpu.memory_space<vmem>>, %arg3: memref<32x32xbf16, #tpu.memory_space<vmem>>, %arg4: memref<1x32xf32, #tpu.memory_space<vmem>>, %arg5: memref<8x32xf32, #tpu.memory_space<vmem>>) attributes {dimension_semantics = [#tpu.dimension_semantics<parallel>, #tpu.dimension_semantics<parallel>], iteration_bounds = array<i64: 1, 1>, scalar_prefetch = 0 : i64, scratch_operands = 0 : i64, tpu.core_type = #tpu.core_type<tc>, window_params = [{transform_indices = @transform_0, window_bounds = array<i64: 8, 32>}, {transform_indices = @transform_1, window_bounds = array<i64: 32, 32>}, {transform_indices = @transform_2, window_bounds = array<i64: 1, 32>}, {transform_indices = @transform_3, window_bounds = array<i64: 8, 32>}]} {
    %c0 = arith.constant 0 : index
    %c0_0 = arith.constant 0 : index
    %0 = vector.load %arg2[%c0, %c0_0] : memref<8x32xf32, #tpu.memory_space<vmem>>, vector<8x32xf32>
    %1 = arith.truncf %0 : vector<8x32xf32> to vector<8x32xbf16>
    %c0_1 = arith.constant 0 : index
    %c0_2 = arith.constant 0 : index
    %2 = vector.load %arg3[%c0_1, %c0_2] : memref<32x32xbf16, #tpu.memory_space<vmem>>, vector<32x32xbf16>
    %cst = arith.constant dense<0.000000e+00> : vector<8x32xf32>
    %3 = tpu.matmul %1, %2, %cst {dimension_numbers = #tpu.dot_dimension_numbers<[1], [0], [0], [1], [0, 0, 1, 1], [], []>} : vector<8x32xbf16>, vector<32x32xbf16>, vector<8x32xf32> -> vector<8x32xf32>
    %c0_3 = arith.constant 0 : index
    %c0_4 = arith.constant 0 : index
    %4 = vector.load %arg4[%c0_3, %c0_4] : memref<1x32xf32, #tpu.memory_space<vmem>>, vector<1x32xf32>
    %5 = vector.broadcast %4 : vector<1x32xf32> to vector<8x32xf32>
    %6 = arith.addf %3, %5 : vector<8x32xf32>
    %7 = math.tanh %6 : vector<8x32xf32>
    %c0_5 = arith.constant 0 : index
    %c0_6 = arith.constant 0 : index
    %8 = vector.load %arg5[%c0_5, %c0_6] : memref<8x32xf32, #tpu.memory_space<vmem>>, vector<8x32xf32>
    tpu.vector_store %arg5[%c0_5, %c0_6], %7 {strides = array<i32>} : memref<8x32xf32, #tpu.memory_space<vmem>>, vector<8x32xf32>,
    return
  }
  func.func @transform_0(%arg0: i32, %arg1: i32) -> (i32, i32) {
    %c0_i32 = arith.constant 0 : i32
    %c0_i32_0 = arith.constant 0 : i32
    return %arg0, %c0_i32 : i32, i32
  }
  func.func @transform_1(%arg0: i32, %arg1: i32) -> (i32, i32) {
    %c0_i32 = arith.constant 0 : i32
    %c0_i32_0 = arith.constant 0 : i32
    return %c0_i32, %arg1 : i32, i32
  }
  func.func @transform_2(%arg0: i32, %arg1: i32) -> (i32, i32) {
    %c0_i32 = arith.constant 0 : i32
    %c0_i32_0 = arith.constant 0 : i32
    return %c0_i32, %arg1 : i32, i32
  }
  func.func @transform_3(%arg0: i32, %arg1: i32) -> (i32, i32) {
    %c0_i32 = arith.constant 0 : i32
    return %arg0, %arg1 : i32, i32
  }
}

module attributes {stable_mosaic.version = 11 : i64} {
  func.func @_linear_kernel(%arg0: i32, %arg1: i32, %arg2: memref<8x32xf32, #tpu.memory_space<vmem>>, %arg3: memref<32x2xbf16, #tpu.memory_space<vmem>>, %arg4: memref<1x2xf32, #tpu.memory_space<vmem>>, %arg5: memref<8x2xf32, #tpu.memory_space<vmem>>) attributes {dimension_semantics = [#tpu.dimension_semantics<parallel>, #tpu.dimension_semantics<parallel>], iteration_bounds = array<i64: 1, 1>, scalar_prefetch = 0 : i64, scratch_operands = 0 : i64, tpu.core_type = #tpu.core_type<tc>, window_params = [{transform_indices = @transform_0, window_bounds = array<i64: 8, 32>}, {transform_indices = @transform_1, window_bounds = array<i64: 32, 2>}, {transform_indices = @transform_2, window_bounds = array<i64: 1, 2>}, {transform_indices = @transform_3, window_bounds = array<i64: 8, 2>}]} {
    %c0 = arith.constant 0 : index
    %c0_0 = arith.constant 0 : index
    %0 = vector.load %arg2[%c0, %c0_0] : memref<8x32xf32, #tpu.memory_space<vmem>>, vector<8x32xf32>
    %1 = arith.truncf %0 : vector<8x32xf32> to vector<8x32xbf16>
    %c0_1 = arith.constant 0 : index
    %c0_2 = arith.constant 0 : index
    %2 = vector.load %arg3[%c0_1, %c0_2] : memref<32x2xbf16, #tpu.memory_space<vmem>>, vector<32x2xbf16>
    %cst = arith.constant dense<0.000000e+00> : vector<8x2xf32>
    %3 = tpu.matmul %1, %2, %cst {dimension_numbers = #tpu.dot_dimension_numbers<[1], [0], [0], [1], [0, 0, 1, 1], [], []>} : vector<8x32xbf16>, vector<32x2xbf16>, vector<8x2xf32> -> vector<8x2xf32>
    %c0_3 = arith.constant 0 : index
    %c0_4 = arith.constant 0 : index
    %4 = vector.load %arg4[%c0_3, %c0_4] : memref<1x2xf32, #tpu.memory_space<vmem>>, vector<1x2xf32>
    %5 = vector.broadcast %4 : vector<1x2xf32> to vector<8x2xf32>
    %6 = arith.addf %3, %5 : vector<8x2xf32>
    %c0_5 = arith.constant 0 : index
    %c0_6 = arith.constant 0 : index
    %7 = vector.load %arg5[%c0_5, %c0_6] : memref<8x2xf32, #tpu.memory_space<vmem>>, vector<8x2xf32>
    tpu.vector_store %arg5[%c0_5, %c0_6], %6 {strides = array<i32>} : memref<8x2xf32, #tpu.memory_space<vmem>>, vector<8x2xf32>,
    return
  }
  func.func @transform_0(%arg0: i32, %arg1: i32) -> (i32, i32) {
    %c0_i32 = arith.constant 0 : i32
    %c0_i32_0 = arith.constant 0 : i32
    return %arg0, %c0_i32 : i32, i32
  }
  func.func @transform_1(%arg0: i32, %arg1: i32) -> (i32, i32) {
    %c0_i32 = arith.constant 0 : i32
    %c0_i32_0 = arith.constant 0 : i32
    return %c0_i32, %arg1 : i32, i32
  }
  func.func @transform_2(%arg0: i32, %arg1: i32) -> (i32, i32) {
    %c0_i32 = arith.constant 0 : i32
    %c0_i32_0 = arith.constant 0 : i32
    return %c0_i32, %arg1 : i32, i32
  }
  func.func @transform_3(%arg0: i32, %arg1: i32) -> (i32, i32) {
    %c0_i32 = arith.constant 0 : i32
    return %arg0, %arg1 : i32, i32
  }
}

module attributes {stable_mosaic.version = 11 : i64} {
  func.func @_ce_kernel(%arg0: i32, %arg1: memref<2x2xf32, #tpu.memory_space<vmem>>, %arg2: memref<2xi32, #tpu.memory_space<smem>>, %arg3: memref<1x1xf32, #tpu.memory_space<vmem>>) attributes {dimension_semantics = [#tpu.dimension_semantics<arbitrary>], iteration_bounds = array<i64: 1>, scalar_prefetch = 0 : i64, scratch_operands = 0 : i64, tpu.core_type = #tpu.core_type<tc>, window_params = [{pipeline_mode = #tpu.pipeline_mode<synchronous>, transform_indices = @transform_0, window_bounds = array<i64: 2, 2>}, {transform_indices = @transform_1, window_bounds = array<i64: 2>}, {pipeline_mode = #tpu.pipeline_mode<synchronous>, transform_indices = @transform_2, window_bounds = array<i64: 1, 1>}]} {
    %c0 = arith.constant 0 : index
    %c0_0 = arith.constant 0 : index
    %0 = vector.load %arg1[%c0, %c0_0] : memref<2x2xf32, #tpu.memory_space<vmem>>, vector<2x2xf32>
    %cst = arith.constant dense<0xFF800000> : vector<2xf32>
    %1 = vector.multi_reduction <maximumf>, %0, %cst [1] : vector<2x2xf32> to vector<2xf32>
    %2 = vector.shape_cast %1 : vector<2xf32> to vector<2x1xf32>
    %3 = vector.broadcast %2 : vector<2x1xf32> to vector<2x2xf32>
    %4 = arith.subf %0, %3 : vector<2x2xf32>
    %5 = math.exp %4 : vector<2x2xf32>
    %cst_1 = arith.constant dense<0.000000e+00> : vector<2xf32>
    %6 = vector.multi_reduction <add>, %5, %cst_1 [1] : vector<2x2xf32> to vector<2xf32>
    %7 = vector.shape_cast %6 : vector<2xf32> to vector<2x1xf32>
    %8 = math.log %7 : vector<2x1xf32>
    %9 = arith.addf %8, %2 : vector<2x1xf32>
    %10 = tpu.iota {dimensions = array<i32: 1>} : vector<1x2xi32>
    %c0_2 = arith.constant 0 : index
    %11 = memref.load %arg2[%c0_2] : memref<2xi32, #tpu.memory_space<smem>>
    %12 = vector.broadcast %11 : i32 to vector<1x2xi32>
    %13 = arith.cmpi eq, %10, %12 : vector<1x2xi32>
    %14 = arith.extui %13 : vector<1x2xi1> to vector<1x2xi32>
    %15 = arith.sitofp %14 : vector<1x2xi32> to vector<1x2xf32>
    %16 = vector.extract_strided_slice %9 {offsets = [0, 0], sizes = [1, 1], strides = [1, 1]} : vector<2x1xf32> to vector<1x1xf32>
    %17 = vector.extract_strided_slice %0 {offsets = [0, 0], sizes = [1, 2], strides = [1, 1]} : vector<2x2xf32> to vector<1x2xf32>
    %18 = vector.broadcast %16 : vector<1x1xf32> to vector<1x2xf32>
    %19 = arith.subf %18, %17 : vector<1x2xf32>
    %20 = arith.mulf %19, %15 : vector<1x2xf32>
    %21 = vector.shape_cast %20 : vector<1x2xf32> to vector<1x1x2xf32>
    %cst_3 = arith.constant dense<0.000000e+00> : vector<1xf32>
    %22 = vector.multi_reduction <add>, %21, %cst_3 [1, 2] : vector<1x1x2xf32> to vector<1xf32>
    %23 = vector.shape_cast %22 : vector<1xf32> to vector<1x1x1xf32>
    %24 = vector.extract %23[0, 0, 0] : f32 from vector<1x1x1xf32>
    %cst_4 = arith.constant 0.000000e+00 : f32
    %25 = arith.addf %cst_4, %24 : f32
    %c1 = arith.constant 1 : index
    %26 = memref.load %arg2[%c1] : memref<2xi32, #tpu.memory_space<smem>>
    %27 = vector.broadcast %26 : i32 to vector<1x2xi32>
    %28 = arith.cmpi eq, %10, %27 : vector<1x2xi32>
    %29 = arith.extui %28 : vector<1x2xi1> to vector<1x2xi32>
    %30 = arith.sitofp %29 : vector<1x2xi32> to vector<1x2xf32>
    %31 = vector.extract_strided_slice %9 {offsets = [1, 0], sizes = [1, 1], strides = [1, 1]} : vector<2x1xf32> to vector<1x1xf32>
    %32 = vector.extract_strided_slice %0 {offsets = [1, 0], sizes = [1, 2], strides = [1, 1]} : vector<2x2xf32> to vector<1x2xf32>
    %33 = vector.broadcast %31 : vector<1x1xf32> to vector<1x2xf32>
    %34 = arith.subf %33, %32 : vector<1x2xf32>
    %35 = arith.mulf %34, %30 : vector<1x2xf32>
    %36 = vector.shape_cast %35 : vector<1x2xf32> to vector<1x1x2xf32>
    %cst_5 = arith.constant dense<0.000000e+00> : vector<1xf32>
    %37 = vector.multi_reduction <add>, %36, %cst_5 [1, 2] : vector<1x1x2xf32> to vector<1xf32>
    %38 = vector.shape_cast %37 : vector<1xf32> to vector<1x1x1xf32>
    %39 = vector.extract %38[0, 0, 0] : f32 from vector<1x1x1xf32>
    %40 = arith.addf %25, %39 : f32
    %cst_6 = arith.constant 2.000000e+00 : f32
    %41 = arith.divf %40, %cst_6 : f32
    %42 = vector.broadcast %41 : f32 to vector<1x1xf32>
    %c0_7 = arith.constant 0 : index
    %c0_8 = arith.constant 0 : index
    %43 = vector.load %arg3[%c0_7, %c0_8] : memref<1x1xf32, #tpu.memory_space<vmem>>, vector<1x1xf32>
    tpu.vector_store %arg3[%c0_7, %c0_8], %42 {strides = array<i32>} : memref<1x1xf32, #tpu.memory_space<vmem>>, vector<1x1xf32>,
    return
  }
  func.func @transform_0(%arg0: i32) -> (i32, i32) {
    %c0_i32 = arith.constant 0 : i32
    %c0_i32_0 = arith.constant 0 : i32
    %c0_i32_1 = arith.constant 0 : i32
    return %c0_i32, %c0_i32_0 : i32, i32
  }
  func.func @transform_1(%arg0: i32) -> i32 {
    %c0_i32 = arith.constant 0 : i32
    %c0_i32_0 = arith.constant 0 : i32
    return %c0_i32 : i32
  }
  func.func @transform_2(%arg0: i32) -> (i32, i32) {
    %c0_i32 = arith.constant 0 : i32
    %c0_i32_0 = arith.constant 0 : i32
    %c0_i32_1 = arith.constant 0 : i32
    return %c0_i32, %c0_i32_0 : i32, i32
  }
}

</mosaic_0001>

<llo_original>
// kernel: bert_forward.17
$region0: #{bert_forward.17}
  #allocation0 [shape = 'u32[]', space=smem, size = 0x4, offset = 0x4, fixed_abs, tag = 'smem constant byte address 0x4 - core index']
  #allocation1 [shape = 'u32[144,128]{1,0:T(1,128)}', space=vmem, size = 0x12000, scoped, tag = 'internal scratch']
  %s0 = inlined_call_operand.vmem [shape: f32[16,32], index: 0, kind: input, shape index: {}]
  %s1 = inlined_call_operand.vmem [shape: bf16[32,32], index: 1, kind: input, shape index: {}]
  %s2 = inlined_call_operand.vmem [shape: f32[1,32], index: 2, kind: input, shape index: {}]
  %s3 = inlined_call_operand.vmem [shape: f32[16,32], index: 3, kind: input, shape index: {}]
  %s4 = inlined_call_operand.vmem [shape: f32[1,32], index: 4, kind: input, shape index: {}]
  %s5 = inlined_call_operand.vmem [shape: f32[1,32], index: 5, kind: input, shape index: {}]
  %s6 = inlined_call_operand.vmem [shape: f32[16,32], index: 6, kind: output, shape index: {}]
  %s7 = sld [smem:[#allocation0]]
  $region34: #{bert_forward.17} parent=0
    _
  %s9 = ssub.s32 1, %s7
  %s10 = scalar_select 0, %s9, %s7
  // Predicated region
  $region2: #{bert_forward.17} parent=0 // pred_check
    _
  $region3: #{bert_forward.17} parent=0 // pred_check_branch
    %12 = sbr.rel (0) target = $region5
  $region4: #{bert_forward.17} parent=0 // pred_region
    _
  $region5: #{bert_forward.17} parent=0 // pred_fallthru
    _
  // Predicated region
  $region6: #{bert_forward.17} parent=0 // pred_check
    _
  $region7: #{bert_forward.17} parent=0 // pred_check_branch
    %14 = sbr.rel (0) target = $region9
  $region8: #{bert_forward.17} parent=0 // pred_region
    _
  $region9: #{bert_forward.17} parent=0 // pred_fallthru
    _
  // Predicated region
  $region10: #{bert_forward.17} parent=0 // pred_check
    _
  $region11: #{bert_forward.17} parent=0 // pred_check_branch
    %16 = sbr.rel (0) target = $region13
  $region12: #{bert_forward.17} parent=0 // pred_region
    _
  $region13: #{bert_forward.17} parent=0 // pred_fallthru
    _
  // Predicated region
  $region14: #{bert_forward.17} parent=0 // pred_check
    _
  $region15: #{bert_forward.17} parent=0 // pred_check_branch
    %18 = sbr.rel (0) target = $region17
  $region16: #{bert_forward.17} parent=0 // pred_region
    _
  $region17: #{bert_forward.17} parent=0 // pred_fallthru
    _
  // Predicated region
  $region18: #{bert_forward.17} parent=0 // pred_check
    _
  $region19: #{bert_forward.17} parent=0 // pred_check_branch
    %20 = sbr.rel (0) target = $region21
  $region20: #{bert_forward.17} parent=0 // pred_region
    _
  $region21: #{bert_forward.17} parent=0 // pred_fallthru
    _
  // Predicated region
  $region22: #{bert_forward.17} parent=0 // pred_check
    _
  $region23: #{bert_forward.17} parent=0 // pred_check_branch
    %22 = sbr.rel (0) target = $region25
  $region24: #{bert_forward.17} parent=0 // pred_region
    _
  $region25: #{bert_forward.17} parent=0 // pred_fallthru
    _
  %v24 = vld [vmem:[%s0] sm:$0xff]
  %v25 = vld [vmem:[%s0 + $0x8] sm:$0xff]
  %v26 = vpack.c.bf16 %v25, %v24
  %v27 = vld [vmem:[%s1] sm:$0xf]
  %v28 = vld [vmem:[%s1 + $0x4] sm:$0xf]
  %v29 = vld [vmem:[%s1 + $0x8] sm:$0xf]
  %v30 = vld [vmem:[%s1 + $0xc] sm:$0xf]
  %v31 = vld [vmem:[%s2] sm:$0x1]
  %v33 = vlaneseq
  %v34 = vshrl.u32 %v33, 7
  %v35 = vsub.s32 0, %v34
  %v36 = vrot.slane %v31, %v35
  %v42 = vunpack.c.l.b16 %v27
  %v43 = vunpack.c.l.b16 %v28
  %v44 = vunpack.c.l.b16 %v29
  %v45 = vunpack.c.l.b16 %v30
  %v46 = vpack.c.b16 %v43, %v42
  %v47 = vpack.c.b16 %v45, %v44
  %vm50 = vcmask 261120
  %v52 = vsel %vm50, %v26, 0
  %54 = vmatprep.subr.bf16.mxu0 0
  %55 = vmatpush1.bf16.msra.mxu0 0
  %56 = vmatprep.subr.bf16.mxu0 0
  %57 = vmatpush1.bf16.msra.mxu0 0
  %58 = vmatprep.subr.bf16.mxu0 0
  %59 = vmatpush1.bf16.msra.mxu0 0
  %60 = vmatprep.subr.bf16.mxu0 0
  %61 = vmatpush1.bf16.msra.mxu0 0
  %62 = vmatprep.subr.bf16.mxu0 0
  %63 = vmatpush1.bf16.msra.mxu0 0
  %64 = vmatprep.subr.bf16.mxu0 0
  %65 = vmatpush1.bf16.msra.mxu0 0
  %66 = vmatprep.subr.bf16.mxu0 0
  %67 = vmatpush1.bf16.msra.mxu0 %v47
  %68 = vmatprep.subr.bf16.mxu0 0
  %69 = vmatpush1.bf16.msra.mxu0 %v46
  %70 = vmatprep.subr.bf16.mxu0 0
  %71 = vmatpush2.bf16.msra.mxu0 0
  %72 = vmatprep.subr.bf16.mxu0 0
  %73 = vmatpush2.bf16.msra.mxu0 0
  %74 = vmatprep.subr.bf16.mxu0 0
  %75 = vmatpush2.bf16.msra.mxu0 0
  %76 = vmatprep.subr.bf16.mxu0 0
  %77 = vmatpush2.bf16.msra.mxu0 0
  %78 = vmatprep.subr.bf16.mxu0 0
  %79 = vmatpush2.bf16.msra.mxu0 0
  %80 = vmatprep.subr.bf16.mxu0 0
  %81 = vmatpush2.bf16.msra.mxu0 0
  %82 = vmatprep.subr.bf16.mxu0 0
  %83 = vmatpush2.bf16.msra.mxu0 0
  %84 = vmatprep.subr.bf16.mxu0 0
  %85 = vmatpush2.bf16.msra.mxu0 0
  %86 = vmatprep.mubr.bf16.mxu0 0
  %87 = vmatmul.mubr.bf16.gmra.mxu0 %v52
  %v88 = vpop.f32.mrf.mxu0
  %v89 = vadd.f32 %v36, %v88
  %v90 = vpop.f32.mrf.mxu0
  %v91 = vpop.f32.mrf.mxu0
  %v92 = vadd.f32 %v36, %v91
  %v93 = vpop.f32.mrf.mxu0
  %94 = vdwg.mxu0
  %v95 = vld [vmem:[%s3] sm:$0xff]
  %v96 = vld [vmem:[%s3 + $0x8] sm:$0xff]
  %v97 = vadd.f32 %v89, %v95
  %v98 = vadd.f32 %v92, %v96
  %v99 = vsel %vm50, %v97, 0.0
  %100 = vadd.xlane.f32.xlu0 %v99
  %v101 = vpop.xlane.xlu0 %100
  %v102 = vsel %vm50, %v98, 0.0
  %103 = vadd.xlane.f32.xlu0 %v102
  %v104 = vpop.xlane.xlu0 %103
  %v105 = vrcp.pop 32.0
  %v106 = vmul.f32 %v101, %v105
  %v107 = vmul.f32 %v104, %v105
  %v108 = vsub.f32 %v97, %v106
  %v109 = vsub.f32 %v98, %v107
  %v110 = vmul.f32 %v108, %v108
  %v111 = vmul.f32 %v109, %v109
  %v112 = vsel %vm50, %v110, 0.0
  %113 = vadd.xlane.f32.xlu0 %v112
  %v114 = vpop.xlane.xlu0 %113
  %v115 = vsel %vm50, %v111, 0.0
  %116 = vadd.xlane.f32.xlu0 %v115
  %v117 = vpop.xlane.xlu0 %116
  %v118 = vmul.f32 %v114, %v105
  %v119 = vmul.f32 %v117, %v105
  %v120 = vadd.f32 %v118, 1e-12
  %v121 = vadd.f32 %v119, 1e-12
  %v122 = vrsqrt.pop %v120
  %v123 = vrsqrt.pop %v121
  %v124 = vmul.f32 %v108, %v122
  %v125 = vmul.f32 %v109, %v123
  %v126 = vld [vmem:[%s4] sm:$0x1]
  %v128 = vlaneseq
  %v129 = vshrl.u32 %v128, 7
  %v130 = vsub.s32 0, %v129
  %v131 = vrot.slane %v126, %v130
  %v133 = vmul.f32 %v124, %v131
  %v134 = vmul.f32 %v125, %v131
  %v135 = vld [vmem:[%s5] sm:$0x1]
  %v137 = vlaneseq
  %v138 = vshrl.u32 %v137, 7
  %v139 = vsub.s32 0, %v138
  %v140 = vrot.slane %v135, %v139
  %v142 = vadd.f32 %v133, %v140
  %v143 = vadd.f32 %v134, %v140
  %144 = vst.msk [vmem:[%s6] sm:$0xff] %vm50, %v142
  %145 = vst.msk [vmem:[%s6 + $0x8] sm:$0xff] %vm50, %v143
  // Predicated region
  $region26: #{bert_forward.17} parent=0 // pred_check
    _
  $region27: #{bert_forward.17} parent=0 // pred_check_branch
    %147 = sbr.rel (0) target = $region29
  $region28: #{bert_forward.17} parent=0 // pred_region
    _
  $region29: #{bert_forward.17} parent=0 // pred_fallthru
    _
  // Predicated region
  $region30: #{bert_forward.17} parent=0 // pred_check
    _
  $region31: #{bert_forward.17} parent=0 // pred_check_branch
    %149 = sbr.rel (0) target = $region33
  $region32: #{bert_forward.17} parent=0 // pred_region
    _
  $region33: #{bert_forward.17} parent=0 // pred_fallthru
    _

// kernel: bert_forward.15
$region0: #{bert_forward.15}
  #allocation0 [shape = 'u32[]', space=smem, size = 0x4, offset = 0x4, fixed_abs, tag = 'smem constant byte address 0x4 - core index']
  #allocation1 [shape = 'u32[144,128]{1,0:T(1,128)}', space=vmem, size = 0x12000, scoped, tag = 'internal scratch']
  %s0 = inlined_call_operand.vmem [shape: f32[16,32], index: 0, kind: input, shape index: {}]
  %s1 = inlined_call_operand.vmem [shape: bf16[32,96], index: 1, kind: input, shape index: {}]
  %s2 = inlined_call_operand.vmem [shape: f32[1,96], index: 2, kind: input, shape index: {}]
  %s3 = inlined_call_operand.vmem [shape: f32[16,96], index: 3, kind: output, shape index: {}]
  %s4 = sld [smem:[#allocation0]]
  $region22: #{bert_forward.15} parent=0
    _
  %s6 = ssub.s32 1, %s4
  %s7 = scalar_select 0, %s6, %s4
  // Predicated region
  $region2: #{bert_forward.15} parent=0 // pred_check
    _
  $region3: #{bert_forward.15} parent=0 // pred_check_branch
    %9 = sbr.rel (0) target = $region5
  $region4: #{bert_forward.15} parent=0 // pred_region
    _
  $region5: #{bert_forward.15} parent=0 // pred_fallthru
    _
  // Predicated region
  $region6: #{bert_forward.15} parent=0 // pred_check
    _
  $region7: #{bert_forward.15} parent=0 // pred_check_branch
    %11 = sbr.rel (0) target = $region9
  $region8: #{bert_forward.15} parent=0 // pred_region
    _
  $region9: #{bert_forward.15} parent=0 // pred_fallthru
    _
  // Predicated region
  $region10: #{bert_forward.15} parent=0 // pred_check
    _
  $region11: #{bert_forward.15} parent=0 // pred_check_branch
    %13 = sbr.rel (0) target = $region13
  $region12: #{bert_forward.15} parent=0 // pred_region
    _
  $region13: #{bert_forward.15} parent=0 // pred_fallthru
    _
  %v15 = vld [vmem:[%s0] sm:$0xff]
  %v16 = vld [vmem:[%s0 + $0x8] sm:$0xff]
  %v17 = vpack.c.bf16 %v16, %v15
  %v18 = vld [vmem:[%s1] sm:$0xf]
  %v19 = vld [vmem:[%s1 + $0x4] sm:$0xf]
  %v20 = vld [vmem:[%s1 + $0x8] sm:$0xf]
  %v21 = vld [vmem:[%s1 + $0xc] sm:$0xf]
  %v22 = vld [vmem:[%s2] sm:$0x1]
  %v24 = vlaneseq
  %v25 = vshrl.u32 %v24, 7
  %v26 = vsub.s32 0, %v25
  %v27 = vrot.slane %v22, %v26
  %v33 = vunpack.c.l.b16 %v18
  %v34 = vunpack.c.l.b16 %v19
  %v35 = vunpack.c.l.b16 %v20
  %v36 = vunpack.c.l.b16 %v21
  %v37 = vpack.c.b16 %v34, %v33
  %v38 = vpack.c.b16 %v36, %v35
  %vm41 = vcmask 261120
  %v43 = vsel %vm41, %v17, 0
  %45 = vmatprep.subr.bf16.mxu0 0
  %46 = vmatpush1.bf16.msra.mxu0 0
  %47 = vmatprep.subr.bf16.mxu0 0
  %48 = vmatpush1.bf16.msra.mxu0 0
  %49 = vmatprep.subr.bf16.mxu0 0
  %50 = vmatpush1.bf16.msra.mxu0 0
  %51 = vmatprep.subr.bf16.mxu0 0
  %52 = vmatpush1.bf16.msra.mxu0 0
  %53 = vmatprep.subr.bf16.mxu0 0
  %54 = vmatpush1.bf16.msra.mxu0 0
  %55 = vmatprep.subr.bf16.mxu0 0
  %56 = vmatpush1.bf16.msra.mxu0 0
  %57 = vmatprep.subr.bf16.mxu0 0
  %58 = vmatpush1.bf16.msra.mxu0 %v38
  %59 = vmatprep.subr.bf16.mxu0 0
  %60 = vmatpush1.bf16.msra.mxu0 %v37
  %61 = vmatprep.subr.bf16.mxu0 0
  %62 = vmatpush2.bf16.msra.mxu0 0
  %63 = vmatprep.subr.bf16.mxu0 0
  %64 = vmatpush2.bf16.msra.mxu0 0
  %65 = vmatprep.subr.bf16.mxu0 0
  %66 = vmatpush2.bf16.msra.mxu0 0
  %67 = vmatprep.subr.bf16.mxu0 0
  %68 = vmatpush2.bf16.msra.mxu0 0
  %69 = vmatprep.subr.bf16.mxu0 0
  %70 = vmatpush2.bf16.msra.mxu0 0
  %71 = vmatprep.subr.bf16.mxu0 0
  %72 = vmatpush2.bf16.msra.mxu0 0
  %73 = vmatprep.subr.bf16.mxu0 0
  %74 = vmatpush2.bf16.msra.mxu0 0
  %75 = vmatprep.subr.bf16.mxu0 0
  %76 = vmatpush2.bf16.msra.mxu0 0
  %77 = vmatprep.mubr.bf16.mxu0 0
  %78 = vmatmul.mubr.bf16.gmra.mxu0 %v43
  %v79 = vpop.f32.mrf.mxu0
  %v80 = vadd.f32 %v27, %v79
  %v81 = vpop.f32.mrf.mxu0
  %v82 = vpop.f32.mrf.mxu0
  %v83 = vadd.f32 %v27, %v82
  %v84 = vpop.f32.mrf.mxu0
  %85 = vdwg.mxu0
  %vm86 = vcmask 785408
  %87 = vst.msk [vmem:[%s3] sm:$0xff] %vm86, %v80
  %88 = vst.msk [vmem:[%s3 + $0x8] sm:$0xff] %vm86, %v83
  // Predicated region
  $region14: #{bert_forward.15} parent=0 // pred_check
    _
  $region15: #{bert_forward.15} parent=0 // pred_check_branch
    %90 = sbr.rel (0) target = $region17
  $region16: #{bert_forward.15} parent=0 // pred_region
    _
  $region17: #{bert_forward.15} parent=0 // pred_fallthru
    _
  // Predicated region
  $region18: #{bert_forward.15} parent=0 // pred_check
    _
  $region19: #{bert_forward.15} parent=0 // pred_check_branch
    %92 = sbr.rel (0) target = $region21
  $region20: #{bert_forward.15} parent=0 // pred_region
    _
  $region21: #{bert_forward.15} parent=0 // pred_fallthru
    _

// kernel: bert_forward.14
$region0: #{bert_forward.14}
  #allocation0 [shape = 'u32[]', space=smem, size = 0x4, offset = 0x4, fixed_abs, tag = 'smem constant byte address 0x4 - core index']
  #allocation1 [shape = 'u32[144,128]{1,0:T(1,128)}', space=vmem, size = 0x12000, scoped, tag = 'internal scratch']
  %s0 = inlined_call_operand.vmem [shape: f32[16,32], index: 0, kind: input, shape index: {}]
  %s1 = inlined_call_operand.vmem [shape: f32[1,32], index: 1, kind: input, shape index: {}]
  %s2 = inlined_call_operand.vmem [shape: f32[1,32], index: 2, kind: input, shape index: {}]
  %s3 = inlined_call_operand.vmem [shape: f32[16,32], index: 3, kind: output, shape index: {}]
  %s4 = sld [smem:[#allocation0]]
  $region22: #{bert_forward.14} parent=0
    _
  %s6 = ssub.s32 1, %s4
  %s7 = scalar_select 0, %s6, %s4
  // Predicated region
  $region2: #{bert_forward.14} parent=0 // pred_check
    _
  $region3: #{bert_forward.14} parent=0 // pred_check_branch
    %9 = sbr.rel (0) target = $region5
  $region4: #{bert_forward.14} parent=0 // pred_region
    _
  $region5: #{bert_forward.14} parent=0 // pred_fallthru
    _
  // Predicated region
  $region6: #{bert_forward.14} parent=0 // pred_check
    _
  $region7: #{bert_forward.14} parent=0 // pred_check_branch
    %11 = sbr.rel (0) target = $region9
  $region8: #{bert_forward.14} parent=0 // pred_region
    _
  $region9: #{bert_forward.14} parent=0 // pred_fallthru
    _
  // Predicated region
  $region10: #{bert_forward.14} parent=0 // pred_check
    _
  $region11: #{bert_forward.14} parent=0 // pred_check_branch
    %13 = sbr.rel (0) target = $region13
  $region12: #{bert_forward.14} parent=0 // pred_region
    _
  $region13: #{bert_forward.14} parent=0 // pred_fallthru
    _
  %v14 = vld [vmem:[%s0] sm:$0xff]
  %v15 = vld [vmem:[%s0 + $0x8] sm:$0xff]
  %vm16 = vcmask 261120
  %v17 = vsel %vm16, %v14, 0.0
  %18 = vadd.xlane.f32.xlu0 %v17
  %v19 = vpop.xlane.xlu0 %18
  %v20 = vsel %vm16, %v15, 0.0
  %21 = vadd.xlane.f32.xlu0 %v20
  %v22 = vpop.xlane.xlu0 %21
  %v23 = vrcp.pop 32.0
  %v24 = vmul.f32 %v19, %v23
  %v25 = vmul.f32 %v22, %v23
  %v26 = vsub.f32 %v14, %v24
  %v27 = vsub.f32 %v15, %v25
  %v28 = vmul.f32 %v26, %v26
  %v29 = vmul.f32 %v27, %v27
  %v30 = vsel %vm16, %v28, 0.0
  %31 = vadd.xlane.f32.xlu0 %v30
  %v32 = vpop.xlane.xlu0 %31
  %v33 = vsel %vm16, %v29, 0.0
  %34 = vadd.xlane.f32.xlu0 %v33
  %v35 = vpop.xlane.xlu0 %34
  %v36 = vmul.f32 %v32, %v23
  %v37 = vmul.f32 %v35, %v23
  %v38 = vadd.f32 %v36, 1e-12
  %v39 = vadd.f32 %v37, 1e-12
  %v40 = vrsqrt.pop %v38
  %v41 = vrsqrt.pop %v39
  %v42 = vmul.f32 %v26, %v40
  %v43 = vmul.f32 %v27, %v41
  %v44 = vld [vmem:[%s1] sm:$0x1]
  %v46 = vlaneseq
  %v47 = vshrl.u32 %v46, 7
  %v48 = vsub.s32 0, %v47
  %v49 = vrot.slane %v44, %v48
  %v51 = vmul.f32 %v42, %v49
  %v52 = vmul.f32 %v43, %v49
  %v53 = vld [vmem:[%s2] sm:$0x1]
  %v55 = vlaneseq
  %v56 = vshrl.u32 %v55, 7
  %v57 = vsub.s32 0, %v56
  %v58 = vrot.slane %v53, %v57
  %v60 = vadd.f32 %v51, %v58
  %v61 = vadd.f32 %v52, %v58
  %62 = vst.msk [vmem:[%s3] sm:$0xff] %vm16, %v60
  %63 = vst.msk [vmem:[%s3 + $0x8] sm:$0xff] %vm16, %v61
  // Predicated region
  $region14: #{bert_forward.14} parent=0 // pred_check
    _
  $region15: #{bert_forward.14} parent=0 // pred_check_branch
    %65 = sbr.rel (0) target = $region17
  $region16: #{bert_forward.14} parent=0 // pred_region
    _
  $region17: #{bert_forward.14} parent=0 // pred_fallthru
    _
  // Predicated region
  $region18: #{bert_forward.14} parent=0 // pred_check
    _
  $region19: #{bert_forward.14} parent=0 // pred_check_branch
    %67 = sbr.rel (0) target = $region21
  $region20: #{bert_forward.14} parent=0 // pred_region
    _
  $region21: #{bert_forward.14} parent=0 // pred_fallthru
    _

// kernel: bert_forward.16
$region0: #{bert_forward.16}
  #allocation0 [shape = 'u32[]', space=smem, size = 0x4, offset = 0x4, fixed_abs, tag = 'smem constant byte address 0x4 - core index']
  #allocation1 [shape = 'u32[144,128]{1,0:T(1,128)}', space=vmem, size = 0x12000, scoped, tag = 'internal scratch']
  %s0 = inlined_call_operand.vmem [shape: f32[2,8,96], index: 0, kind: input, shape index: {}]
  %s1 = inlined_call_operand.vmem [shape: f32[2,8,32], index: 1, kind: output, shape index: {}]
  %s2 = sld [smem:[#allocation0]]
  $region37: #{bert_forward.16} parent=0
    _
  %s4 = ssub.s32 1, %s2
  %s5 = scalar_select 0, %s4, %s2
  loop: start=0, step=1, limit=4
  $region2: #{bert_forward.16} parent=0 // loop_pre_header
    _
  $region3: #{bert_forward.16} parent=0 // loop_header
    %s7 = sphi 0, %s11
    %p8 = scmp.ge.s32.totalorder %s7, 4
    %s17 = sphi 0, %s19
    %s20 = sphi 0, %s17
    %s21 = sphi 0, %s20
    %s37 = sphi 0, %s21
    %s43 = sphi 0, %s45
    %s46 = sphi 0, %s43
    %s47 = sphi 0, %s46
    %s63 = sphi 0, %s47
  $region4: #{bert_forward.16} parent=0 // loop_header_branch
    %10 = sbr.rel (%p8) target = $region8
  $region5: #{bert_forward.16} parent=0 // loop_body
    %s12 = ssub.s32 %s7, 1
    %s13 = ssub.s32 %s7, 2
    %s14 = sadd.s32 %s7, 1
    %s15 = ssub.s32 %s7, %s14
    %p16 = scmp.eq.s32.totalorder %s15, 0
    %s18 = sadd.s32 %s17, 1
    %s19 = scalar_select %p16, %s17, %s18
    %p22 = pneg %p16
    %p23 = scmp.eq.s32.totalorder %s7, 1
    %p24 = por %p22, %p23
    %p25 = scmp.ne.s32.totalorder %s17, %s20
    %p26 = scmp.eq.s32.totalorder %s7, 0
    %p27 = por %p25, %p26
    %p28 = scmp.ne.s32.totalorder %s17, %s20
    %p29 = scmp.eq.s32.totalorder %s12, 1
    %p30 = por %p28, %p29
    %p31 = scmp.ne.s32.totalorder %s20, %s21
    %p32 = scmp.eq.s32.totalorder %s12, 0
    %p33 = por %p31, %p32
    %p34 = scmp.ne.s32.totalorder %s20, %s21
    %p35 = scmp.eq.s32.totalorder %s13, 1
    %p36 = por %p34, %p35
    %p38 = scmp.ne.s32.totalorder %s21, %s37
    %p39 = scmp.eq.s32.totalorder %s13, 0
    %p40 = por %p38, %p39
    %s41 = ssub.s32 %s7, %s14
    %p42 = scmp.eq.s32.totalorder %s41, 0
    %s44 = sadd.s32 %s43, 1
    %s45 = scalar_select %p42, %s43, %s44
    %p48 = pneg %p42
    %p49 = scmp.eq.s32.totalorder %s7, 1
    %p50 = por %p48, %p49
    %p51 = scmp.ne.s32.totalorder %s43, %s46
    %p52 = scmp.eq.s32.totalorder %s7, 0
    %p53 = por %p51, %p52
    %p54 = scmp.ne.s32.totalorder %s43, %s46
    %p55 = scmp.eq.s32.totalorder %s12, 1
    %p56 = por %p54, %p55
    %p57 = scmp.ne.s32.totalorder %s46, %s47
    %p58 = scmp.eq.s32.totalorder %s12, 0
    %p59 = por %p57, %p58
    %p60 = scmp.ne.s32.totalorder %s46, %s47
    %p61 = scmp.eq.s32.totalorder %s13, 1
    %p62 = por %p60, %p61
    %p64 = scmp.ne.s32.totalorder %s47, %s63
    %p65 = scmp.eq.s32.totalorder %s13, 0
    %p66 = por %p64, %p65
    %p67 = scmp.le.s32.totalorder 1, %s7
    %p68 = scmp.lt.s32.totalorder %s7, 3
    %p69 = pnand %p67, %p68
    %p70 = pneg %p69
    // Predicated region
    $region9: #{bert_forward.16} parent=5 // pred_check
      _
    $region10: #{bert_forward.16} parent=5 // pred_check_branch
      %72 = sbr.rel (%p69) target = $region12
    $region11: #{bert_forward.16} parent=5 // pred_region
      %s73 = ssub.s32 %s7, 1
    $region12: #{bert_forward.16} parent=5 // pred_fallthru
      _
    %p74 = scmp.lt.s32.totalorder %s7, 2
    // Predicated region
    $region13: #{bert_forward.16} parent=5 // pred_check
      %p75 = pneg %p74
    $region14: #{bert_forward.16} parent=5 // pred_check_branch
      %77 = sbr.rel (%p75) target = $region16
    $region15: #{bert_forward.16} parent=5 // pred_region
      // Predicated region
      $region17: #{bert_forward.16} parent=15 // pred_check
        %p78 = pneg %p27
      $region18: #{bert_forward.16} parent=15 // pred_check_branch
        %80 = sbr.rel (%p78) target = $region20
      $region19: #{bert_forward.16} parent=15 // pred_region
        %p81 = scmp.lt.s32.totalorder %s7, 1
        %s82 = scalar_select %p81, %s7, 1
        %s83 = smul.addr %s82, 8
        %s84 = scalar_lea.vmem %s0, %s83
      $region20: #{bert_forward.16} parent=15 // pred_fallthru
        _
    $region16: #{bert_forward.16} parent=5 // pred_fallthru
      _
    %p85 = scmp.le.s32.totalorder 1, %s7
    %p86 = scmp.lt.s32.totalorder %s7, 3
    %p87 = pnand %p85, %p86
    %p88 = pneg %p87
    // Predicated region
    $region21: #{bert_forward.16} parent=5 // pred_check
      _
    $region22: #{bert_forward.16} parent=5 // pred_check_branch
      %90 = sbr.rel (%p87) target = $region24
    $region23: #{bert_forward.16} parent=5 // pred_region
      %s91 = ssub.s32 %s7, 1
      %p92 = scmp.lt.s32.totalorder %s12, 1
      %s93 = scalar_select %p92, %s12, 1
      %s94 = smul.addr %s93, 8
      %s95 = scalar_lea.vmem %s0, %s94
      %p96 = pneg %p33
      %p97 = pneg %p30
      %p98 = pneg %p59
      %p99 = pneg %p56
      %p100 = scmp.lt.s32.totalorder %s12, 1
      %s101 = scalar_select %p100, %s12, 1
      %s102 = smul.addr %s101, 8
      %s103 = scalar_lea.vmem %s1, %s102
      %p104 = scmp.lt.s32.totalorder %s12, 1
      %s105 = scalar_select %p104, %s12, 1
      %s106 = smul.addr %s105, 8
      %s107 = scalar_lea.vmem %s0, %s106
      %p108 = scmp.lt.s32.totalorder %s12, 1
      %s109 = scalar_select %p108, %s12, 1
      %s110 = smul.addr %s109, 8
      %s111 = scalar_lea.vmem %s1, %s110
      %v113 = vld [vmem:[%s107] sm:$0xff]
      %v114 = vpack.c.bf16 %v113, %v113
      %116 = vrot.lane.b32.xlu0 %v113, 96
      %v117 = vpop.permute.xlu0 %116
      %119 = vxpose.xlu0.b32.start [1/16] %v117, 128
      %120 = vxpose.xlu0.b32.cont [2/16] 0.0, 128
      %121 = vxpose.xlu0.b32.cont [3/16] 0.0, 128
      %122 = vxpose.xlu0.b32.cont [4/16] 0.0, 128
      %123 = vxpose.xlu0.b32.cont [5/16] 0.0, 128
      %124 = vxpose.xlu0.b32.cont [6/16] 0.0, 128
      %125 = vxpose.xlu0.b32.cont [7/16] 0.0, 128
      %126 = vxpose.xlu0.b32.cont [8/16] 0.0, 128
      %127 = vxpose.xlu0.b32.cont [9/16] 0.0, 128
      %128 = vxpose.xlu0.b32.cont [10/16] 0.0, 128
      %129 = vxpose.xlu0.b32.cont [11/16] 0.0, 128
      %130 = vxpose.xlu0.b32.cont [12/16] 0.0, 128
      %131 = vxpose.xlu0.b32.cont [13/16] 0.0, 128
      %132 = vxpose.xlu0.b32.cont [14/16] 0.0, 128
      %133 = vxpose.xlu0.b32.cont [15/16] 0.0, 128
      %134 = vxpose.xlu0.b32.end [16/16] 0.0, 128
      %v135 = vpop.trf.xlu0
      %v136 = vpop.trf.xlu0
      %v137 = vpop.trf.xlu0
      %v138 = vpop.trf.xlu0
      %v139 = vpop.trf.xlu0
      %v140 = vpop.trf.xlu0
      %v141 = vpop.trf.xlu0
      %v142 = vpop.trf.xlu0
      %v143 = vpop.trf.xlu0
      %v144 = vpop.trf.xlu0
      %v145 = vpop.trf.xlu0
      %v146 = vpop.trf.xlu0
      %v147 = vpop.trf.xlu0
      %v148 = vpop.trf.xlu0
      %v149 = vpop.trf.xlu0
      %v150 = vpop.trf.xlu0
      %v151 = vpack.c.bf16 %v135, %v135
      %vm152 = vcmask 64512
      %v154 = vsel %vm152, %v114, 0
      %vm156 = vcmask 1043456
      %v158 = vsel %vm156, %v151, 0
      %160 = vmatprep.subr.bf16.mxu0 0
      %161 = vmatpush1.bf16.msra.mxu0 0
      %162 = vmatprep.subr.bf16.mxu0 0
      %163 = vmatpush1.bf16.msra.mxu0 0
      %164 = vmatprep.subr.bf16.mxu0 0
      %165 = vmatpush1.bf16.msra.mxu0 0
      %166 = vmatprep.subr.bf16.mxu0 0
      %167 = vmatpush1.bf16.msra.mxu0 0
      %168 = vmatprep.subr.bf16.mxu0 0
      %169 = vmatpush1.bf16.msra.mxu0 0
      %170 = vmatprep.subr.bf16.mxu0 0
      %171 = vmatpush1.bf16.msra.mxu0 0
      %172 = vmatprep.subr.bf16.mxu0 0
      %173 = vmatpush1.bf16.msra.mxu0 0
      %174 = vmatprep.subr.bf16.mxu0 0
      %175 = vmatpush1.bf16.msra.mxu0 %v158
      %176 = vmatprep.subr.bf16.mxu0 0
      %177 = vmatpush2.bf16.msra.mxu0 0
      %178 = vmatprep.subr.bf16.mxu0 0
      %179 = vmatpush2.bf16.msra.mxu0 0
      %180 = vmatprep.subr.bf16.mxu0 0
      %181 = vmatpush2.bf16.msra.mxu0 0
      %182 = vmatprep.subr.bf16.mxu0 0
      %183 = vmatpush2.bf16.msra.mxu0 0
      %184 = vmatprep.subr.bf16.mxu0 0
      %185 = vmatpush2.bf16.msra.mxu0 0
      %186 = vmatprep.subr.bf16.mxu0 0
      %187 = vmatpush2.bf16.msra.mxu0 0
      %188 = vmatprep.subr.bf16.mxu0 0
      %189 = vmatpush2.bf16.msra.mxu0 0
      %190 = vmatprep.subr.bf16.mxu0 0
      %191 = vmatpush2.bf16.msra.mxu0 0
      %192 = vmatprep.mubr.bf16.mxu0 0
      %193 = vmatmul.mubr.bf16.gmra.mxu0 %v154
      %v194 = vpop.f32.mrf.mxu0
      %v195 = vadd.f32 0.0, %v194
      %v196 = vpop.f32.mrf.mxu0
      %v197 = vpop.f32.mrf.mxu0
      %v198 = vpop.f32.mrf.mxu0
      %199 = vdwg.mxu0
      %v200 = vmul.f32 %v195, 0.35355338
      %v201 = vsel %vm152, %v200, -inf
      %202 = vmax.xlane.f32.xlu0 %v201
      %v203 = vpop.xlane.xlu0 %202
      %v204 = vsub.f32 %v200, %v203
      %v205 = vmul.f32 %v204, 1.442695
      %v206 = vpow.pop %v205
      %v207 = vsel %vm152, %v206, 0.0
      %208 = vadd.xlane.f32.xlu0 %v207
      %v209 = vpop.xlane.xlu0 %208
      %v210 = vrcp.pop %v209
      %v211 = vmul.f32 %v206, %v210
      %v212 = vpack.c.bf16 %v211, %v211
      %214 = vrot.lane.b32.xlu0 %v114, 64
      %v215 = vpop.permute.xlu0 %214
      %v217 = vsel %vm152, %v212, 0
      %v220 = vsel %vm156, %v215, 0
      %222 = vmatprep.subr.bf16.mxu0 0
      %223 = vmatpush1.bf16.msra.mxu0 0
      %224 = vmatprep.subr.bf16.mxu0 0
      %225 = vmatpush1.bf16.msra.mxu0 0
      %226 = vmatprep.subr.bf16.mxu0 0
      %227 = vmatpush1.bf16.msra.mxu0 0
      %228 = vmatprep.subr.bf16.mxu0 0
      %229 = vmatpush1.bf16.msra.mxu0 0
      %230 = vmatprep.subr.bf16.mxu0 0
      %231 = vmatpush1.bf16.msra.mxu0 0
      %232 = vmatprep.subr.bf16.mxu0 0
      %233 = vmatpush1.bf16.msra.mxu0 0
      %234 = vmatprep.subr.bf16.mxu0 0
      %235 = vmatpush1.bf16.msra.mxu0 0
      %236 = vmatprep.subr.bf16.mxu0 0
      %237 = vmatpush1.bf16.msra.mxu0 %v220
      %238 = vmatprep.subr.bf16.mxu0 0
      %239 = vmatpush2.bf16.msra.mxu0 0
      %240 = vmatprep.subr.bf16.mxu0 0
      %241 = vmatpush2.bf16.msra.mxu0 0
      %242 = vmatprep.subr.bf16.mxu0 0
      %243 = vmatpush2.bf16.msra.mxu0 0
      %244 = vmatprep.subr.bf16.mxu0 0
      %245 = vmatpush2.bf16.msra.mxu0 0
      %246 = vmatprep.subr.bf16.mxu0 0
      %247 = vmatpush2.bf16.msra.mxu0 0
      %248 = vmatprep.subr.bf16.mxu0 0
      %249 = vmatpush2.bf16.msra.mxu0 0
      %250 = vmatprep.subr.bf16.mxu0 0
      %251 = vmatpush2.bf16.msra.mxu0 0
      %252 = vmatprep.subr.bf16.mxu0 0
      %253 = vmatpush2.bf16.msra.mxu0 0
      %254 = vmatprep.mubr.bf16.mxu0 0
      %255 = vmatmul.mubr.bf16.gmra.mxu0 %v217
      %v256 = vpop.f32.mrf.mxu0
      %v257 = vadd.f32 0.0, %v256
      %v258 = vpop.f32.mrf.mxu0
      %v259 = vpop.f32.mrf.mxu0
      %v260 = vpop.f32.mrf.mxu0
      %261 = vdwg.mxu0
      %262 = vrot.lane.b32.xlu0 %v113, 88
      %v263 = vpop.permute.xlu0 %262
      %265 = vxpose.xlu0.b32.start [1/16] %v263, 128
      %266 = vxpose.xlu0.b32.cont [2/16] 0.0, 128
      %267 = vxpose.xlu0.b32.cont [3/16] 0.0, 128
      %268 = vxpose.xlu0.b32.cont [4/16] 0.0, 128
      %269 = vxpose.xlu0.b32.cont [5/16] 0.0, 128
      %270 = vxpose.xlu0.b32.cont [6/16] 0.0, 128
      %271 = vxpose.xlu0.b32.cont [7/16] 0.0, 128
      %272 = vxpose.xlu0.b32.cont [8/16] 0.0, 128
      %273 = vxpose.xlu0.b32.cont [9/16] 0.0, 128
      %274 = vxpose.xlu0.b32.cont [10/16] 0.0, 128
      %275 = vxpose.xlu0.b32.cont [11/16] 0.0, 128
      %276 = vxpose.xlu0.b32.cont [12/16] 0.0, 128
      %277 = vxpose.xlu0.b32.cont [13/16] 0.0, 128
      %278 = vxpose.xlu0.b32.cont [14/16] 0.0, 128
      %279 = vxpose.xlu0.b32.cont [15/16] 0.0, 128
      %280 = vxpose.xlu0.b32.end [16/16] 0.0, 128
      %v281 = vpop.trf.xlu0
      %v282 = vpop.trf.xlu0
      %v283 = vpop.trf.xlu0
      %v284 = vpop.trf.xlu0
      %v285 = vpop.trf.xlu0
      %v286 = vpop.trf.xlu0
      %v287 = vpop.trf.xlu0
      %v288 = vpop.trf.xlu0
      %v289 = vpop.trf.xlu0
      %v290 = vpop.trf.xlu0
      %v291 = vpop.trf.xlu0
      %v292 = vpop.trf.xlu0
      %v293 = vpop.trf.xlu0
      %v294 = vpop.trf.xlu0
      %v295 = vpop.trf.xlu0
      %v296 = vpop.trf.xlu0
      %v297 = vpack.c.bf16 %v281, %v281
      %298 = vrot.lane.b32.xlu0 %v114, 120
      %v299 = vpop.permute.xlu0 %298
      %v301 = vsel %vm152, %v299, 0
      %v304 = vsel %vm156, %v297, 0
      %306 = vmatprep.subr.bf16.mxu0 0
      %307 = vmatpush1.bf16.msra.mxu0 0
      %308 = vmatprep.subr.bf16.mxu0 0
      %309 = vmatpush1.bf16.msra.mxu0 0
      %310 = vmatprep.subr.bf16.mxu0 0
      %311 = vmatpush1.bf16.msra.mxu0 0
      %312 = vmatprep.subr.bf16.mxu0 0
      %313 = vmatpush1.bf16.msra.mxu0 0
      %314 = vmatprep.subr.bf16.mxu0 0
      %315 = vmatpush1.bf16.msra.mxu0 0
      %316 = vmatprep.subr.bf16.mxu0 0
      %317 = vmatpush1.bf16.msra.mxu0 0
      %318 = vmatprep.subr.bf16.mxu0 0
      %319 = vmatpush1.bf16.msra.mxu0 0
      %320 = vmatprep.subr.bf16.mxu0 0
      %321 = vmatpush1.bf16.msra.mxu0 %v304
      %322 = vmatprep.subr.bf16.mxu0 0
      %323 = vmatpush2.bf16.msra.mxu0 0
      %324 = vmatprep.subr.bf16.mxu0 0
      %325 = vmatpush2.bf16.msra.mxu0 0
      %326 = vmatprep.subr.bf16.mxu0 0
      %327 = vmatpush2.bf16.msra.mxu0 0
      %328 = vmatprep.subr.bf16.mxu0 0
      %329 = vmatpush2.bf16.msra.mxu0 0
      %330 = vmatprep.subr.bf16.mxu0 0
      %331 = vmatpush2.bf16.msra.mxu0 0
      %332 = vmatprep.subr.bf16.mxu0 0
      %333 = vmatpush2.bf16.msra.mxu0 0
      %334 = vmatprep.subr.bf16.mxu0 0
      %335 = vmatpush2.bf16.msra.mxu0 0
      %336 = vmatprep.subr.bf16.mxu0 0
      %337 = vmatpush2.bf16.msra.mxu0 0
      %338 = vmatprep.mubr.bf16.mxu0 0
      %339 = vmatmul.mubr.bf16.gmra.mxu0 %v301
      %v340 = vpop.f32.mrf.mxu0
      %v341 = vadd.f32 0.0, %v340
      %v342 = vpop.f32.mrf.mxu0
      %v343 = vpop.f32.mrf.mxu0
      %v344 = vpop.f32.mrf.mxu0
      %345 = vdwg.mxu0
      %v346 = vmul.f32 %v341, 0.35355338
      %v347 = vsel %vm152, %v346, -inf
      %348 = vmax.xlane.f32.xlu0 %v347
      %v349 = vpop.xlane.xlu0 %348
      %v350 = vsub.f32 %v346, %v349
      %v351 = vmul.f32 %v350, 1.442695
      %v352 = vpow.pop %v351
      %v353 = vsel %vm152, %v352, 0.0
      %354 = vadd.xlane.f32.xlu0 %v353
      %v355 = vpop.xlane.xlu0 %354
      %v356 = vrcp.pop %v355
      %v357 = vmul.f32 %v352, %v356
      %v358 = vpack.c.bf16 %v357, %v357
      %359 = vrot.lane.b32.xlu0 %v114, 56
      %v360 = vpop.permute.xlu0 %359
      %v362 = vsel %vm152, %v358, 0
      %v365 = vsel %vm156, %v360, 0
      %367 = vmatprep.subr.bf16.mxu0 0
      %368 = vmatpush1.bf16.msra.mxu0 0
      %369 = vmatprep.subr.bf16.mxu0 0
      %370 = vmatpush1.bf16.msra.mxu0 0
      %371 = vmatprep.subr.bf16.mxu0 0
      %372 = vmatpush1.bf16.msra.mxu0 0
      %373 = vmatprep.subr.bf16.mxu0 0
      %374 = vmatpush1.bf16.msra.mxu0 0
      %375 = vmatprep.subr.bf16.mxu0 0
      %376 = vmatpush1.bf16.msra.mxu0 0
      %377 = vmatprep.subr.bf16.mxu0 0
      %378 = vmatpush1.bf16.msra.mxu0 0
      %379 = vmatprep.subr.bf16.mxu0 0
      %380 = vmatpush1.bf16.msra.mxu0 0
      %381 = vmatprep.subr.bf16.mxu0 0
      %382 = vmatpush1.bf16.msra.mxu0 %v365
      %383 = vmatprep.subr.bf16.mxu0 0
      %384 = vmatpush2.bf16.msra.mxu0 0
      %385 = vmatprep.subr.bf16.mxu0 0
      %386 = vmatpush2.bf16.msra.mxu0 0
      %387 = vmatprep.subr.bf16.mxu0 0
      %388 = vmatpush2.bf16.msra.mxu0 0
      %389 = vmatprep.subr.bf16.mxu0 0
      %390 = vmatpush2.bf16.msra.mxu0 0
      %391 = vmatprep.subr.bf16.mxu0 0
      %392 = vmatpush2.bf16.msra.mxu0 0
      %393 = vmatprep.subr.bf16.mxu0 0
      %394 = vmatpush2.bf16.msra.mxu0 0
      %395 = vmatprep.subr.bf16.mxu0 0
      %396 = vmatpush2.bf16.msra.mxu0 0
      %397 = vmatprep.subr.bf16.mxu0 0
      %398 = vmatpush2.bf16.msra.mxu0 0
      %399 = vmatprep.mubr.bf16.mxu0 0
      %400 = vmatmul.mubr.bf16.gmra.mxu0 %v362
      %v401 = vpop.f32.mrf.mxu0
      %v402 = vadd.f32 0.0, %v401
      %v403 = vpop.f32.mrf.mxu0
      %v404 = vpop.f32.mrf.mxu0
      %v405 = vpop.f32.mrf.mxu0
      %406 = vdwg.mxu0
      %407 = vrot.lane.b32.xlu0 %v113, 80
      %v408 = vpop.permute.xlu0 %407
      %410 = vxpose.xlu0.b32.start [1/16] %v408, 128
      %411 = vxpose.xlu0.b32.cont [2/16] 0.0, 128
      %412 = vxpose.xlu0.b32.cont [3/16] 0.0, 128
      %413 = vxpose.xlu0.b32.cont [4/16] 0.0, 128
      %414 = vxpose.xlu0.b32.cont [5/16] 0.0, 128
      %415 = vxpose.xlu0.b32.cont [6/16] 0.0, 128
      %416 = vxpose.xlu0.b32.cont [7/16] 0.0, 128
      %417 = vxpose.xlu0.b32.cont [8/16] 0.0, 128
      %418 = vxpose.xlu0.b32.cont [9/16] 0.0, 128
      %419 = vxpose.xlu0.b32.cont [10/16] 0.0, 128
      %420 = vxpose.xlu0.b32.cont [11/16] 0.0, 128
      %421 = vxpose.xlu0.b32.cont [12/16] 0.0, 128
      %422 = vxpose.xlu0.b32.cont [13/16] 0.0, 128
      %423 = vxpose.xlu0.b32.cont [14/16] 0.0, 128
      %424 = vxpose.xlu0.b32.cont [15/16] 0.0, 128
      %425 = vxpose.xlu0.b32.end [16/16] 0.0, 128
      %v426 = vpop.trf.xlu0
      %v427 = vpop.trf.xlu0
      %v428 = vpop.trf.xlu0
      %v429 = vpop.trf.xlu0
      %v430 = vpop.trf.xlu0
      %v431 = vpop.trf.xlu0
      %v432 = vpop.trf.xlu0
      %v433 = vpop.trf.xlu0
      %v434 = vpop.trf.xlu0
      %v435 = vpop.trf.xlu0
      %v436 = vpop.trf.xlu0
      %v437 = vpop.trf.xlu0
      %v438 = vpop.trf.xlu0
      %v439 = vpop.trf.xlu0
      %v440 = vpop.trf.xlu0
      %v441 = vpop.trf.xlu0
      %v442 = vpack.c.bf16 %v426, %v426
      %443 = vrot.lane.b32.xlu0 %v114, 112
      %v444 = vpop.permute.xlu0 %443
      %v446 = vsel %vm152, %v444, 0
      %v449 = vsel %vm156, %v442, 0
      %451 = vmatprep.subr.bf16.mxu0 0
      %452 = vmatpush1.bf16.msra.mxu0 0
      %453 = vmatprep.subr.bf16.mxu0 0
      %454 = vmatpush1.bf16.msra.mxu0 0
      %455 = vmatprep.subr.bf16.mxu0 0
      %456 = vmatpush1.bf16.msra.mxu0 0
      %457 = vmatprep.subr.bf16.mxu0 0
      %458 = vmatpush1.bf16.msra.mxu0 0
      %459 = vmatprep.subr.bf16.mxu0 0
      %460 = vmatpush1.bf16.msra.mxu0 0
      %461 = vmatprep.subr.bf16.mxu0 0
      %462 = vmatpush1.bf16.msra.mxu0 0
      %463 = vmatprep.subr.bf16.mxu0 0
      %464 = vmatpush1.bf16.msra.mxu0 0
      %465 = vmatprep.subr.bf16.mxu0 0
      %466 = vmatpush1.bf16.msra.mxu0 %v449
      %467 = vmatprep.subr.bf16.mxu0 0
      %468 = vmatpush2.bf16.msra.mxu0 0
      %469 = vmatprep.subr.bf16.mxu0 0
      %470 = vmatpush2.bf16.msra.mxu0 0
      %471 = vmatprep.subr.bf16.mxu0 0
      %472 = vmatpush2.bf16.msra.mxu0 0
      %473 = vmatprep.subr.bf16.mxu0 0
      %474 = vmatpush2.bf16.msra.mxu0 0
      %475 = vmatprep.subr.bf16.mxu0 0
      %476 = vmatpush2.bf16.msra.mxu0 0
      %477 = vmatprep.subr.bf16.mxu0 0
      %478 = vmatpush2.bf16.msra.mxu0 0
      %479 = vmatprep.subr.bf16.mxu0 0
      %480 = vmatpush2.bf16.msra.mxu0 0
      %481 = vmatprep.subr.bf16.mxu0 0
      %482 = vmatpush2.bf16.msra.mxu0 0
      %483 = vmatprep.mubr.bf16.mxu0 0
      %484 = vmatmul.mubr.bf16.gmra.mxu0 %v446
      %v485 = vpop.f32.mrf.mxu0
      %v486 = vadd.f32 0.0, %v485
      %v487 = vpop.f32.mrf.mxu0
      %v488 = vpop.f32.mrf.mxu0
      %v489 = vpop.f32.mrf.mxu0
      %490 = vdwg.mxu0
      %v491 = vmul.f32 %v486, 0.35355338
      %v492 = vsel %vm152, %v491, -inf
      %493 = vmax.xlane.f32.xlu0 %v492
      %v494 = vpop.xlane.xlu0 %493
      %v495 = vsub.f32 %v491, %v494
      %v496 = vmul.f32 %v495, 1.442695
      %v497 = vpow.pop %v496
      %v498 = vsel %vm152, %v497, 0.0
      %499 = vadd.xlane.f32.xlu0 %v498
      %v500 = vpop.xlane.xlu0 %499
      %v501 = vrcp.pop %v500
      %v502 = vmul.f32 %v497, %v501
      %v503 = vpack.c.bf16 %v502, %v502
      %504 = vrot.lane.b32.xlu0 %v114, 48
      %v505 = vpop.permute.xlu0 %504
      %v507 = vsel %vm152, %v503, 0
      %v510 = vsel %vm156, %v505, 0
      %512 = vmatprep.subr.bf16.mxu0 0
      %513 = vmatpush1.bf16.msra.mxu0 0
      %514 = vmatprep.subr.bf16.mxu0 0
      %515 = vmatpush1.bf16.msra.mxu0 0
      %516 = vmatprep.subr.bf16.mxu0 0
      %517 = vmatpush1.bf16.msra.mxu0 0
      %518 = vmatprep.subr.bf16.mxu0 0
      %519 = vmatpush1.bf16.msra.mxu0 0
      %520 = vmatprep.subr.bf16.mxu0 0
      %521 = vmatpush1.bf16.msra.mxu0 0
      %522 = vmatprep.subr.bf16.mxu0 0
      %523 = vmatpush1.bf16.msra.mxu0 0
      %524 = vmatprep.subr.bf16.mxu0 0
      %525 = vmatpush1.bf16.msra.mxu0 0
      %526 = vmatprep.subr.bf16.mxu0 0
      %527 = vmatpush1.bf16.msra.mxu0 %v510
      %528 = vmatprep.subr.bf16.mxu0 0
      %529 = vmatpush2.bf16.msra.mxu0 0
      %530 = vmatprep.subr.bf16.mxu0 0
      %531 = vmatpush2.bf16.msra.mxu0 0
      %532 = vmatprep.subr.bf16.mxu0 0
      %533 = vmatpush2.bf16.msra.mxu0 0
      %534 = vmatprep.subr.bf16.mxu0 0
      %535 = vmatpush2.bf16.msra.mxu0 0
      %536 = vmatprep.subr.bf16.mxu0 0
      %537 = vmatpush2.bf16.msra.mxu0 0
      %538 = vmatprep.subr.bf16.mxu0 0
      %539 = vmatpush2.bf16.msra.mxu0 0
      %540 = vmatprep.subr.bf16.mxu0 0
      %541 = vmatpush2.bf16.msra.mxu0 0
      %542 = vmatprep.subr.bf16.mxu0 0
      %543 = vmatpush2.bf16.msra.mxu0 0
      %544 = vmatprep.mubr.bf16.mxu0 0
      %545 = vmatmul.mubr.bf16.gmra.mxu0 %v507
      %v546 = vpop.f32.mrf.mxu0
      %v547 = vadd.f32 0.0, %v546
      %v548 = vpop.f32.mrf.mxu0
      %v549 = vpop.f32.mrf.mxu0
      %v550 = vpop.f32.mrf.mxu0
      %551 = vdwg.mxu0
      %552 = vrot.lane.b32.xlu0 %v113, 72
      %v553 = vpop.permute.xlu0 %552
      %555 = vxpose.xlu0.b32.start [1/16] %v553, 128
      %556 = vxpose.xlu0.b32.cont [2/16] 0.0, 128
      %557 = vxpose.xlu0.b32.cont [3/16] 0.0, 128
      %558 = vxpose.xlu0.b32.cont [4/16] 0.0, 128
      %559 = vxpose.xlu0.b32.cont [5/16] 0.0, 128
      %560 = vxpose.xlu0.b32.cont [6/16] 0.0, 128
      %561 = vxpose.xlu0.b32.cont [7/16] 0.0, 128
      %562 = vxpose.xlu0.b32.cont [8/16] 0.0, 128
      %563 = vxpose.xlu0.b32.cont [9/16] 0.0, 128
      %564 = vxpose.xlu0.b32.cont [10/16] 0.0, 128
      %565 = vxpose.xlu0.b32.cont [11/16] 0.0, 128
      %566 = vxpose.xlu0.b32.cont [12/16] 0.0, 128
      %567 = vxpose.xlu0.b32.cont [13/16] 0.0, 128
      %568 = vxpose.xlu0.b32.cont [14/16] 0.0, 128
      %569 = vxpose.xlu0.b32.cont [15/16] 0.0, 128
      %570 = vxpose.xlu0.b32.end [16/16] 0.0, 128
      %v571 = vpop.trf.xlu0
      %v572 = vpop.trf.xlu0
      %v573 = vpop.trf.xlu0
      %v574 = vpop.trf.xlu0
      %v575 = vpop.trf.xlu0
      %v576 = vpop.trf.xlu0
      %v577 = vpop.trf.xlu0
      %v578 = vpop.trf.xlu0
      %v579 = vpop.trf.xlu0
      %v580 = vpop.trf.xlu0
      %v581 = vpop.trf.xlu0
      %v582 = vpop.trf.xlu0
      %v583 = vpop.trf.xlu0
      %v584 = vpop.trf.xlu0
      %v585 = vpop.trf.xlu0
      %v586 = vpop.trf.xlu0
      %v587 = vpack.c.bf16 %v571, %v571
      %588 = vrot.lane.b32.xlu0 %v114, 104
      %v589 = vpop.permute.xlu0 %588
      %v591 = vsel %vm152, %v589, 0
      %v594 = vsel %vm156, %v587, 0
      %596 = vmatprep.subr.bf16.mxu0 0
      %597 = vmatpush1.bf16.msra.mxu0 0
      %598 = vmatprep.subr.bf16.mxu0 0
      %599 = vmatpush1.bf16.msra.mxu0 0
      %600 = vmatprep.subr.bf16.mxu0 0
      %601 = vmatpush1.bf16.msra.mxu0 0
      %602 = vmatprep.subr.bf16.mxu0 0
      %603 = vmatpush1.bf16.msra.mxu0 0
      %604 = vmatprep.subr.bf16.mxu0 0
      %605 = vmatpush1.bf16.msra.mxu0 0
      %606 = vmatprep.subr.bf16.mxu0 0
      %607 = vmatpush1.bf16.msra.mxu0 0
      %608 = vmatprep.subr.bf16.mxu0 0
      %609 = vmatpush1.bf16.msra.mxu0 0
      %610 = vmatprep.subr.bf16.mxu0 0
      %611 = vmatpush1.bf16.msra.mxu0 %v594
      %612 = vmatprep.subr.bf16.mxu0 0
      %613 = vmatpush2.bf16.msra.mxu0 0
      %614 = vmatprep.subr.bf16.mxu0 0
      %615 = vmatpush2.bf16.msra.mxu0 0
      %616 = vmatprep.subr.bf16.mxu0 0
      %617 = vmatpush2.bf16.msra.mxu0 0
      %618 = vmatprep.subr.bf16.mxu0 0
      %619 = vmatpush2.bf16.msra.mxu0 0
      %620 = vmatprep.subr.bf16.mxu0 0
      %621 = vmatpush2.bf16.msra.mxu0 0
      %622 = vmatprep.subr.bf16.mxu0 0
      %623 = vmatpush2.bf16.msra.mxu0 0
      %624 = vmatprep.subr.bf16.mxu0 0
      %625 = vmatpush2.bf16.msra.mxu0 0
      %626 = vmatprep.subr.bf16.mxu0 0
      %627 = vmatpush2.bf16.msra.mxu0 0
      %628 = vmatprep.mubr.bf16.mxu0 0
      %629 = vmatmul.mubr.bf16.gmra.mxu0 %v591
      %v630 = vpop.f32.mrf.mxu0
      %v631 = vadd.f32 0.0, %v630
      %v632 = vpop.f32.mrf.mxu0
      %v633 = vpop.f32.mrf.mxu0
      %v634 = vpop.f32.mrf.mxu0
      %635 = vdwg.mxu0
      %v636 = vmul.f32 %v631, 0.35355338
      %v637 = vsel %vm152, %v636, -inf
      %638 = vmax.xlane.f32.xlu0 %v637
      %v639 = vpop.xlane.xlu0 %638
      %v640 = vsub.f32 %v636, %v639
      %v641 = vmul.f32 %v640, 1.442695
      %v642 = vpow.pop %v641
      %v643 = vsel %vm152, %v642, 0.0
      %644 = vadd.xlane.f32.xlu0 %v643
      %v645 = vpop.xlane.xlu0 %644
      %v646 = vrcp.pop %v645
      %v647 = vmul.f32 %v642, %v646
      %v648 = vpack.c.bf16 %v647, %v647
      %649 = vrot.lane.b32.xlu0 %v114, 40
      %v650 = vpop.permute.xlu0 %649
      %v652 = vsel %vm152, %v648, 0
      %v655 = vsel %vm156, %v650, 0
      %657 = vmatprep.subr.bf16.mxu0 0
      %658 = vmatpush1.bf16.msra.mxu0 0
      %659 = vmatprep.subr.bf16.mxu0 0
      %660 = vmatpush1.bf16.msra.mxu0 0
      %661 = vmatprep.subr.bf16.mxu0 0
      %662 = vmatpush1.bf16.msra.mxu0 0
      %663 = vmatprep.subr.bf16.mxu0 0
      %664 = vmatpush1.bf16.msra.mxu0 0
      %665 = vmatprep.subr.bf16.mxu0 0
      %666 = vmatpush1.bf16.msra.mxu0 0
      %667 = vmatprep.subr.bf16.mxu0 0
      %668 = vmatpush1.bf16.msra.mxu0 0
      %669 = vmatprep.subr.bf16.mxu0 0
      %670 = vmatpush1.bf16.msra.mxu0 0
      %671 = vmatprep.subr.bf16.mxu0 0
      %672 = vmatpush1.bf16.msra.mxu0 %v655
      %673 = vmatprep.subr.bf16.mxu0 0
      %674 = vmatpush2.bf16.msra.mxu0 0
      %675 = vmatprep.subr.bf16.mxu0 0
      %676 = vmatpush2.bf16.msra.mxu0 0
      %677 = vmatprep.subr.bf16.mxu0 0
      %678 = vmatpush2.bf16.msra.mxu0 0
      %679 = vmatprep.subr.bf16.mxu0 0
      %680 = vmatpush2.bf16.msra.mxu0 0
      %681 = vmatprep.subr.bf16.mxu0 0
      %682 = vmatpush2.bf16.msra.mxu0 0
      %683 = vmatprep.subr.bf16.mxu0 0
      %684 = vmatpush2.bf16.msra.mxu0 0
      %685 = vmatprep.subr.bf16.mxu0 0
      %686 = vmatpush2.bf16.msra.mxu0 0
      %687 = vmatprep.subr.bf16.mxu0 0
      %688 = vmatpush2.bf16.msra.mxu0 0
      %689 = vmatprep.mubr.bf16.mxu0 0
      %690 = vmatmul.mubr.bf16.gmra.mxu0 %v652
      %v691 = vpop.f32.mrf.mxu0
      %v692 = vadd.f32 0.0, %v691
      %v693 = vpop.f32.mrf.mxu0
      %v694 = vpop.f32.mrf.mxu0
      %v695 = vpop.f32.mrf.mxu0
      %696 = vdwg.mxu0
      %698 = vrot.lane.b32.xlu0 %v402, 8
      %v699 = vpop.permute.xlu0 %698
      %702 = vrot.lane.b32.xlu0 %v547, 16
      %v703 = vpop.permute.xlu0 %702
      %706 = vrot.lane.b32.xlu0 %v692, 24
      %v707 = vpop.permute.xlu0 %706
      %v709 = vsel %vm152, %v257, %v699
      %vm710 = vcmask 130048
      %v711 = vsel %vm710, %v709, %v703
      %vm712 = vcmask 195584
      %v713 = vsel %vm712, %v711, %v707
      %vm714 = vcmask 261120
      %715 = vst.msk [vmem:[%s111] sm:$0xff] %vm714, %v713
      %p716 = scmp.lt.s32.totalorder %s12, 1
      %s717 = scalar_select %p716, %s12, 1
      %s718 = smul.addr %s717, 8
      %s719 = scalar_lea.vmem %s1, %s718
      // Predicated region
      $region25: #{bert_forward.16} parent=23 // pred_check
        %p720 = pneg %p56
      $region26: #{bert_forward.16} parent=23 // pred_check_branch
        %722 = sbr.rel (%p720) target = $region28
      $region27: #{bert_forward.16} parent=23 // pred_region
        _
      $region28: #{bert_forward.16} parent=23 // pred_fallthru
        _
    $region24: #{bert_forward.16} parent=5 // pred_fallthru
      _
    %p723 = scmp.le.s32.totalorder 2, %s7
    // Predicated region
    $region29: #{bert_forward.16} parent=5 // pred_check
      %p724 = pneg %p723
    $region30: #{bert_forward.16} parent=5 // pred_check_branch
      %726 = sbr.rel (%p724) target = $region32
    $region31: #{bert_forward.16} parent=5 // pred_region
      %s727 = ssub.s32 %s7, 2
      // Predicated region
      $region33: #{bert_forward.16} parent=31 // pred_check
        %p728 = pneg %p62
      $region34: #{bert_forward.16} parent=31 // pred_check_branch
        %730 = sbr.rel (%p728) target = $region36
      $region35: #{bert_forward.16} parent=31 // pred_region
        %p731 = scmp.lt.s32.totalorder %s13, 1
        %s732 = scalar_select %p731, %s13, 1
        %s733 = smul.addr %s732, 8
        %s734 = scalar_lea.vmem %s1, %s733
      $region36: #{bert_forward.16} parent=31 // pred_fallthru
        _
    $region32: #{bert_forward.16} parent=5 // pred_fallthru
      _
  $region6: #{bert_forward.16} parent=0 // loop_footer
    %s11 = sadd.s32 1, %s7
  $region7: #{bert_forward.16} parent=0 // loop_footer_branch
    %6 = sbr.rel target = $region3
  $region8: #{bert_forward.16} parent=0 // loop_exit
    _

// kernel: bert_forward.19
$region0: #{bert_forward.19}
  #allocation0 [shape = 'u32[]', space=smem, size = 0x4, offset = 0x4, fixed_abs, tag = 'smem constant byte address 0x4 - core index']
  #allocation1 [shape = 'u32[144,128]{1,0:T(1,128)}', space=vmem, size = 0x12000, scoped, tag = 'internal scratch']
  %s0 = inlined_call_operand.vmem [shape: f32[16,64], index: 0, kind: input, shape index: {}]
  %s1 = inlined_call_operand.vmem [shape: bf16[64,32], index: 1, kind: input, shape index: {}]
  %s2 = inlined_call_operand.vmem [shape: f32[1,32], index: 2, kind: input, shape index: {}]
  %s3 = inlined_call_operand.vmem [shape: f32[16,32], index: 3, kind: input, shape index: {}]
  %s4 = inlined_call_operand.vmem [shape: f32[1,32], index: 4, kind: input, shape index: {}]
  %s5 = inlined_call_operand.vmem [shape: f32[1,32], index: 5, kind: input, shape index: {}]
  %s6 = inlined_call_operand.vmem [shape: f32[16,32], index: 6, kind: output, shape index: {}]
  %s7 = sld [smem:[#allocation0]]
  $region34: #{bert_forward.19} parent=0
    _
  %s9 = ssub.s32 1, %s7
  %s10 = scalar_select 0, %s9, %s7
  // Predicated region
  $region2: #{bert_forward.19} parent=0 // pred_check
    _
  $region3: #{bert_forward.19} parent=0 // pred_check_branch
    %12 = sbr.rel (0) target = $region5
  $region4: #{bert_forward.19} parent=0 // pred_region
    _
  $region5: #{bert_forward.19} parent=0 // pred_fallthru
    _
  // Predicated region
  $region6: #{bert_forward.19} parent=0 // pred_check
    _
  $region7: #{bert_forward.19} parent=0 // pred_check_branch
    %14 = sbr.rel (0) target = $region9
  $region8: #{bert_forward.19} parent=0 // pred_region
    _
  $region9: #{bert_forward.19} parent=0 // pred_fallthru
    _
  // Predicated region
  $region10: #{bert_forward.19} parent=0 // pred_check
    _
  $region11: #{bert_forward.19} parent=0 // pred_check_branch
    %16 = sbr.rel (0) target = $region13
  $region12: #{bert_forward.19} parent=0 // pred_region
    _
  $region13: #{bert_forward.19} parent=0 // pred_fallthru
    _
  // Predicated region
  $region14: #{bert_forward.19} parent=0 // pred_check
    _
  $region15: #{bert_forward.19} parent=0 // pred_check_branch
    %18 = sbr.rel (0) target = $region17
  $region16: #{bert_forward.19} parent=0 // pred_region
    _
  $region17: #{bert_forward.19} parent=0 // pred_fallthru
    _
  // Predicated region
  $region18: #{bert_forward.19} parent=0 // pred_check
    _
  $region19: #{bert_forward.19} parent=0 // pred_check_branch
    %20 = sbr.rel (0) target = $region21
  $region20: #{bert_forward.19} parent=0 // pred_region
    _
  $region21: #{bert_forward.19} parent=0 // pred_fallthru
    _
  // Predicated region
  $region22: #{bert_forward.19} parent=0 // pred_check
    _
  $region23: #{bert_forward.19} parent=0 // pred_check_branch
    %22 = sbr.rel (0) target = $region25
  $region24: #{bert_forward.19} parent=0 // pred_region
    _
  $region25: #{bert_forward.19} parent=0 // pred_fallthru
    _
  %v24 = vld [vmem:[%s0] sm:$0xff]
  %v25 = vld [vmem:[%s0 + $0x8] sm:$0xff]
  %v26 = vpack.c.bf16 %v25, %v24
  %v27 = vld [vmem:[%s1] sm:$0xf]
  %v28 = vld [vmem:[%s1 + $0x4] sm:$0xf]
  %v29 = vld [vmem:[%s1 + $0x8] sm:$0xf]
  %v30 = vld [vmem:[%s1 + $0xc] sm:$0xf]
  %v31 = vld [vmem:[%s1 + $0x10] sm:$0xf]
  %v32 = vld [vmem:[%s1 + $0x14] sm:$0xf]
  %v33 = vld [vmem:[%s1 + $0x18] sm:$0xf]
  %v34 = vld [vmem:[%s1 + $0x1c] sm:$0xf]
  %v35 = vld [vmem:[%s2] sm:$0x1]
  %v37 = vlaneseq
  %v38 = vshrl.u32 %v37, 7
  %v39 = vsub.s32 0, %v38
  %v40 = vrot.slane %v35, %v39
  %v50 = vunpack.c.l.b16 %v27
  %v51 = vunpack.c.l.b16 %v28
  %v52 = vunpack.c.l.b16 %v29
  %v53 = vunpack.c.l.b16 %v30
  %v54 = vunpack.c.l.b16 %v31
  %v55 = vunpack.c.l.b16 %v32
  %v56 = vunpack.c.l.b16 %v33
  %v57 = vunpack.c.l.b16 %v34
  %v58 = vpack.c.b16 %v51, %v50
  %v59 = vpack.c.b16 %v53, %v52
  %v60 = vpack.c.b16 %v55, %v54
  %v61 = vpack.c.b16 %v57, %v56
  %vm66 = vcmask 523264
  %v68 = vsel %vm66, %v26, 0
  %70 = vmatprep.subr.bf16.mxu0 0
  %71 = vmatpush1.bf16.msra.mxu0 0
  %72 = vmatprep.subr.bf16.mxu0 0
  %73 = vmatpush1.bf16.msra.mxu0 0
  %74 = vmatprep.subr.bf16.mxu0 0
  %75 = vmatpush1.bf16.msra.mxu0 0
  %76 = vmatprep.subr.bf16.mxu0 0
  %77 = vmatpush1.bf16.msra.mxu0 0
  %78 = vmatprep.subr.bf16.mxu0 0
  %79 = vmatpush1.bf16.msra.mxu0 %v61
  %80 = vmatprep.subr.bf16.mxu0 0
  %81 = vmatpush1.bf16.msra.mxu0 %v60
  %82 = vmatprep.subr.bf16.mxu0 0
  %83 = vmatpush1.bf16.msra.mxu0 %v59
  %84 = vmatprep.subr.bf16.mxu0 0
  %85 = vmatpush1.bf16.msra.mxu0 %v58
  %86 = vmatprep.subr.bf16.mxu0 0
  %87 = vmatpush2.bf16.msra.mxu0 0
  %88 = vmatprep.subr.bf16.mxu0 0
  %89 = vmatpush2.bf16.msra.mxu0 0
  %90 = vmatprep.subr.bf16.mxu0 0
  %91 = vmatpush2.bf16.msra.mxu0 0
  %92 = vmatprep.subr.bf16.mxu0 0
  %93 = vmatpush2.bf16.msra.mxu0 0
  %94 = vmatprep.subr.bf16.mxu0 0
  %95 = vmatpush2.bf16.msra.mxu0 0
  %96 = vmatprep.subr.bf16.mxu0 0
  %97 = vmatpush2.bf16.msra.mxu0 0
  %98 = vmatprep.subr.bf16.mxu0 0
  %99 = vmatpush2.bf16.msra.mxu0 0
  %100 = vmatprep.subr.bf16.mxu0 0
  %101 = vmatpush2.bf16.msra.mxu0 0
  %102 = vmatprep.mubr.bf16.mxu0 0
  %103 = vmatmul.mubr.bf16.gmra.mxu0 %v68
  %v104 = vpop.f32.mrf.mxu0
  %v105 = vadd.f32 %v40, %v104
  %v106 = vpop.f32.mrf.mxu0
  %v107 = vpop.f32.mrf.mxu0
  %v108 = vadd.f32 %v40, %v107
  %v109 = vpop.f32.mrf.mxu0
  %110 = vdwg.mxu0
  %v111 = vld [vmem:[%s3] sm:$0xff]
  %v112 = vld [vmem:[%s3 + $0x8] sm:$0xff]
  %v113 = vadd.f32 %v105, %v111
  %v114 = vadd.f32 %v108, %v112
  %vm115 = vcmask 261120
  %v116 = vsel %vm115, %v113, 0.0
  %117 = vadd.xlane.f32.xlu0 %v116
  %v118 = vpop.xlane.xlu0 %117
  %v119 = vsel %vm115, %v114, 0.0
  %120 = vadd.xlane.f32.xlu0 %v119
  %v121 = vpop.xlane.xlu0 %120
  %v122 = vrcp.pop 32.0
  %v123 = vmul.f32 %v118, %v122
  %v124 = vmul.f32 %v121, %v122
  %v125 = vsub.f32 %v113, %v123
  %v126 = vsub.f32 %v114, %v124
  %v127 = vmul.f32 %v125, %v125
  %v128 = vmul.f32 %v126, %v126
  %v129 = vsel %vm115, %v127, 0.0
  %130 = vadd.xlane.f32.xlu0 %v129
  %v131 = vpop.xlane.xlu0 %130
  %v132 = vsel %vm115, %v128, 0.0
  %133 = vadd.xlane.f32.xlu0 %v132
  %v134 = vpop.xlane.xlu0 %133
  %v135 = vmul.f32 %v131, %v122
  %v136 = vmul.f32 %v134, %v122
  %v137 = vadd.f32 %v135, 1e-12
  %v138 = vadd.f32 %v136, 1e-12
  %v139 = vrsqrt.pop %v137
  %v140 = vrsqrt.pop %v138
  %v141 = vmul.f32 %v125, %v139
  %v142 = vmul.f32 %v126, %v140
  %v143 = vld [vmem:[%s4] sm:$0x1]
  %v145 = vlaneseq
  %v146 = vshrl.u32 %v145, 7
  %v147 = vsub.s32 0, %v146
  %v148 = vrot.slane %v143, %v147
  %v150 = vmul.f32 %v141, %v148
  %v151 = vmul.f32 %v142, %v148
  %v152 = vld [vmem:[%s5] sm:$0x1]
  %v154 = vlaneseq
  %v155 = vshrl.u32 %v154, 7
  %v156 = vsub.s32 0, %v155
  %v157 = vrot.slane %v152, %v156
  %v159 = vadd.f32 %v150, %v157
  %v160 = vadd.f32 %v151, %v157
  %161 = vst.msk [vmem:[%s6] sm:$0xff] %vm115, %v159
  %162 = vst.msk [vmem:[%s6 + $0x8] sm:$0xff] %vm115, %v160
  // Predicated region
  $region26: #{bert_forward.19} parent=0 // pred_check
    _
  $region27: #{bert_forward.19} parent=0 // pred_check_branch
    %164 = sbr.rel (0) target = $region29
  $region28: #{bert_forward.19} parent=0 // pred_region
    _
  $region29: #{bert_forward.19} parent=0 // pred_fallthru
    _
  // Predicated region
  $region30: #{bert_forward.19} parent=0 // pred_check
    _
  $region31: #{bert_forward.19} parent=0 // pred_check_branch
    %166 = sbr.rel (0) target = $region33
  $region32: #{bert_forward.19} parent=0 // pred_region
    _
  $region33: #{bert_forward.19} parent=0 // pred_fallthru
    _

// kernel: bert_forward.18
$region0: #{bert_forward.18}
  #allocation0 [shape = 'u32[]', space=smem, size = 0x4, offset = 0x4, fixed_abs, tag = 'smem constant byte address 0x4 - core index']
  #allocation1 [shape = 'u32[144,128]{1,0:T(1,128)}', space=vmem, size = 0x12000, scoped, tag = 'internal scratch']
  %s0 = inlined_call_operand.vmem [shape: f32[16,32], index: 0, kind: input, shape index: {}]
  %s1 = inlined_call_operand.vmem [shape: bf16[32,64], index: 1, kind: input, shape index: {}]
  %s2 = inlined_call_operand.vmem [shape: f32[1,64], index: 2, kind: input, shape index: {}]
  %s3 = inlined_call_operand.vmem [shape: f32[16,64], index: 3, kind: output, shape index: {}]
  %s4 = sld [smem:[#allocation0]]
  $region22: #{bert_forward.18} parent=0
    _
  %s6 = ssub.s32 1, %s4
  %s7 = scalar_select 0, %s6, %s4
  // Predicated region
  $region2: #{bert_forward.18} parent=0 // pred_check
    _
  $region3: #{bert_forward.18} parent=0 // pred_check_branch
    %9 = sbr.rel (0) target = $region5
  $region4: #{bert_forward.18} parent=0 // pred_region
    _
  $region5: #{bert_forward.18} parent=0 // pred_fallthru
    _
  // Predicated region
  $region6: #{bert_forward.18} parent=0 // pred_check
    _
  $region7: #{bert_forward.18} parent=0 // pred_check_branch
    %11 = sbr.rel (0) target = $region9
  $region8: #{bert_forward.18} parent=0 // pred_region
    _
  $region9: #{bert_forward.18} parent=0 // pred_fallthru
    _
  // Predicated region
  $region10: #{bert_forward.18} parent=0 // pred_check
    _
  $region11: #{bert_forward.18} parent=0 // pred_check_branch
    %13 = sbr.rel (0) target = $region13
  $region12: #{bert_forward.18} parent=0 // pred_region
    _
  $region13: #{bert_forward.18} parent=0 // pred_fallthru
    _
  %v15 = vld [vmem:[%s0] sm:$0xff]
  %v16 = vld [vmem:[%s0 + $0x8] sm:$0xff]
  %v17 = vpack.c.bf16 %v16, %v15
  %v18 = vld [vmem:[%s1] sm:$0xf]
  %v19 = vld [vmem:[%s1 + $0x4] sm:$0xf]
  %v20 = vld [vmem:[%s1 + $0x8] sm:$0xf]
  %v21 = vld [vmem:[%s1 + $0xc] sm:$0xf]
  %v22 = vld [vmem:[%s2] sm:$0x1]
  %v24 = vlaneseq
  %v25 = vshrl.u32 %v24, 7
  %v26 = vsub.s32 0, %v25
  %v27 = vrot.slane %v22, %v26
  %v33 = vunpack.c.l.b16 %v18
  %v34 = vunpack.c.l.b16 %v19
  %v35 = vunpack.c.l.b16 %v20
  %v36 = vunpack.c.l.b16 %v21
  %v37 = vpack.c.b16 %v34, %v33
  %v38 = vpack.c.b16 %v36, %v35
  %vm41 = vcmask 261120
  %v43 = vsel %vm41, %v17, 0
  %45 = vmatprep.subr.bf16.mxu0 0
  %46 = vmatpush1.bf16.msra.mxu0 0
  %47 = vmatprep.subr.bf16.mxu0 0
  %48 = vmatpush1.bf16.msra.mxu0 0
  %49 = vmatprep.subr.bf16.mxu0 0
  %50 = vmatpush1.bf16.msra.mxu0 0
  %51 = vmatprep.subr.bf16.mxu0 0
  %52 = vmatpush1.bf16.msra.mxu0 0
  %53 = vmatprep.subr.bf16.mxu0 0
  %54 = vmatpush1.bf16.msra.mxu0 0
  %55 = vmatprep.subr.bf16.mxu0 0
  %56 = vmatpush1.bf16.msra.mxu0 0
  %57 = vmatprep.subr.bf16.mxu0 0
  %58 = vmatpush1.bf16.msra.mxu0 %v38
  %59 = vmatprep.subr.bf16.mxu0 0
  %60 = vmatpush1.bf16.msra.mxu0 %v37
  %61 = vmatprep.subr.bf16.mxu0 0
  %62 = vmatpush2.bf16.msra.mxu0 0
  %63 = vmatprep.subr.bf16.mxu0 0
  %64 = vmatpush2.bf16.msra.mxu0 0
  %65 = vmatprep.subr.bf16.mxu0 0
  %66 = vmatpush2.bf16.msra.mxu0 0
  %67 = vmatprep.subr.bf16.mxu0 0
  %68 = vmatpush2.bf16.msra.mxu0 0
  %69 = vmatprep.subr.bf16.mxu0 0
  %70 = vmatpush2.bf16.msra.mxu0 0
  %71 = vmatprep.subr.bf16.mxu0 0
  %72 = vmatpush2.bf16.msra.mxu0 0
  %73 = vmatprep.subr.bf16.mxu0 0
  %74 = vmatpush2.bf16.msra.mxu0 0
  %75 = vmatprep.subr.bf16.mxu0 0
  %76 = vmatpush2.bf16.msra.mxu0 0
  %77 = vmatprep.mubr.bf16.mxu0 0
  %78 = vmatmul.mubr.bf16.gmra.mxu0 %v43
  %v79 = vpop.f32.mrf.mxu0
  %v80 = vadd.f32 %v27, %v79
  %v81 = vpop.f32.mrf.mxu0
  %v82 = vpop.f32.mrf.mxu0
  %v83 = vadd.f32 %v27, %v82
  %v84 = vpop.f32.mrf.mxu0
  %85 = vdwg.mxu0
  %v86 = vmul.f32 %v80, 0.5
  %v87 = vmul.f32 %v83, 0.5
  %v88 = vmul.f32 %v80, 0.044715
  %v89 = vmul.f32 %v83, 0.044715
  %v90 = vmul.f32 %v88, %v80
  %v91 = vmul.f32 %v89, %v83
  %v92 = vmul.f32 %v90, %v80
  %v93 = vmul.f32 %v91, %v83
  %v94 = vadd.f32 %v80, %v92
  %v95 = vadd.f32 %v83, %v93
  %v96 = vmul.f32 %v94, 0.7978846
  %v97 = vmul.f32 %v95, 0.7978846
  %v98 = vtanh.pop %v96
  %v99 = vtanh.pop %v97
  %v100 = vadd.f32 %v98, 1.0
  %v101 = vadd.f32 %v99, 1.0
  %v102 = vmul.f32 %v86, %v100
  %v103 = vmul.f32 %v87, %v101
  %vm104 = vcmask 523264
  %105 = vst.msk [vmem:[%s3] sm:$0xff] %vm104, %v102
  %106 = vst.msk [vmem:[%s3 + $0x8] sm:$0xff] %vm104, %v103
  // Predicated region
  $region14: #{bert_forward.18} parent=0 // pred_check
    _
  $region15: #{bert_forward.18} parent=0 // pred_check_branch
    %108 = sbr.rel (0) target = $region17
  $region16: #{bert_forward.18} parent=0 // pred_region
    _
  $region17: #{bert_forward.18} parent=0 // pred_fallthru
    _
  // Predicated region
  $region18: #{bert_forward.18} parent=0 // pred_check
    _
  $region19: #{bert_forward.18} parent=0 // pred_check_branch
    %110 = sbr.rel (0) target = $region21
  $region20: #{bert_forward.18} parent=0 // pred_region
    _
  $region21: #{bert_forward.18} parent=0 // pred_fallthru
    _

// kernel: bert_forward.25
$region0: #{bert_forward.25}
  #allocation0 [shape = 'u32[]', space=smem, size = 0x4, offset = 0x4, fixed_abs, tag = 'smem constant byte address 0x4 - core index']
  #allocation1 [shape = 'u32[144,128]{1,0:T(1,128)}', space=vmem, size = 0x12000, scoped, tag = 'internal scratch']
  %s0 = inlined_call_operand.vmem [shape: f32[8,32], index: 0, kind: input, shape index: {}]
  %s1 = inlined_call_operand.vmem [shape: bf16[32,32], index: 1, kind: input, shape index: {}]
  %s2 = inlined_call_operand.vmem [shape: f32[1,32], index: 2, kind: input, shape index: {}]
  %s3 = inlined_call_operand.vmem [shape: f32[8,32], index: 3, kind: output, shape index: {}]
  %s4 = sld [smem:[#allocation0]]
  $region22: #{bert_forward.25} parent=0
    _
  %s6 = ssub.s32 1, %s4
  %s7 = scalar_select 0, %s6, %s4
  // Predicated region
  $region2: #{bert_forward.25} parent=0 // pred_check
    _
  $region3: #{bert_forward.25} parent=0 // pred_check_branch
    %9 = sbr.rel (0) target = $region5
  $region4: #{bert_forward.25} parent=0 // pred_region
    _
  $region5: #{bert_forward.25} parent=0 // pred_fallthru
    _
  // Predicated region
  $region6: #{bert_forward.25} parent=0 // pred_check
    _
  $region7: #{bert_forward.25} parent=0 // pred_check_branch
    %11 = sbr.rel (0) target = $region9
  $region8: #{bert_forward.25} parent=0 // pred_region
    _
  $region9: #{bert_forward.25} parent=0 // pred_fallthru
    _
  // Predicated region
  $region10: #{bert_forward.25} parent=0 // pred_check
    _
  $region11: #{bert_forward.25} parent=0 // pred_check_branch
    %13 = sbr.rel (0) target = $region13
  $region12: #{bert_forward.25} parent=0 // pred_region
    _
  $region13: #{bert_forward.25} parent=0 // pred_fallthru
    _
  %v15 = vld [vmem:[%s0] sm:$0xff]
  %v16 = vpack.c.bf16 %v15, %v15
  %v17 = vld [vmem:[%s1] sm:$0xf]
  %v18 = vld [vmem:[%s1 + $0x4] sm:$0xf]
  %v19 = vld [vmem:[%s1 + $0x8] sm:$0xf]
  %v20 = vld [vmem:[%s1 + $0xc] sm:$0xf]
  %v21 = vld [vmem:[%s2] sm:$0x1]
  %v23 = vlaneseq
  %v24 = vshrl.u32 %v23, 7
  %v25 = vsub.s32 0, %v24
  %v26 = vrot.slane %v21, %v25
  %v32 = vunpack.c.l.b16 %v17
  %v33 = vunpack.c.l.b16 %v18
  %v34 = vunpack.c.l.b16 %v19
  %v35 = vunpack.c.l.b16 %v20
  %v36 = vpack.c.b16 %v33, %v32
  %v37 = vpack.c.b16 %v35, %v34
  %vm40 = vcmask 261120
  %v42 = vsel %vm40, %v16, 0
  %44 = vmatprep.subr.bf16.mxu0 0
  %45 = vmatpush1.bf16.msra.mxu0 0
  %46 = vmatprep.subr.bf16.mxu0 0
  %47 = vmatpush1.bf16.msra.mxu0 0
  %48 = vmatprep.subr.bf16.mxu0 0
  %49 = vmatpush1.bf16.msra.mxu0 0
  %50 = vmatprep.subr.bf16.mxu0 0
  %51 = vmatpush1.bf16.msra.mxu0 0
  %52 = vmatprep.subr.bf16.mxu0 0
  %53 = vmatpush1.bf16.msra.mxu0 0
  %54 = vmatprep.subr.bf16.mxu0 0
  %55 = vmatpush1.bf16.msra.mxu0 0
  %56 = vmatprep.subr.bf16.mxu0 0
  %57 = vmatpush1.bf16.msra.mxu0 %v37
  %58 = vmatprep.subr.bf16.mxu0 0
  %59 = vmatpush1.bf16.msra.mxu0 %v36
  %60 = vmatprep.subr.bf16.mxu0 0
  %61 = vmatpush2.bf16.msra.mxu0 0
  %62 = vmatprep.subr.bf16.mxu0 0
  %63 = vmatpush2.bf16.msra.mxu0 0
  %64 = vmatprep.subr.bf16.mxu0 0
  %65 = vmatpush2.bf16.msra.mxu0 0
  %66 = vmatprep.subr.bf16.mxu0 0
  %67 = vmatpush2.bf16.msra.mxu0 0
  %68 = vmatprep.subr.bf16.mxu0 0
  %69 = vmatpush2.bf16.msra.mxu0 0
  %70 = vmatprep.subr.bf16.mxu0 0
  %71 = vmatpush2.bf16.msra.mxu0 0
  %72 = vmatprep.subr.bf16.mxu0 0
  %73 = vmatpush2.bf16.msra.mxu0 0
  %74 = vmatprep.subr.bf16.mxu0 0
  %75 = vmatpush2.bf16.msra.mxu0 0
  %76 = vmatprep.mubr.bf16.mxu0 0
  %77 = vmatmul.mubr.bf16.gmra.mxu0 %v42
  %v78 = vpop.f32.mrf.mxu0
  %v79 = vadd.f32 %v26, %v78
  %v80 = vpop.f32.mrf.mxu0
  %v81 = vpop.f32.mrf.mxu0
  %v82 = vpop.f32.mrf.mxu0
  %83 = vdwg.mxu0
  %v84 = vtanh.pop %v79
  %85 = vst.msk [vmem:[%s3] sm:$0xff] %vm40, %v84
  // Predicated region
  $region14: #{bert_forward.25} parent=0 // pred_check
    _
  $region15: #{bert_forward.25} parent=0 // pred_check_branch
    %87 = sbr.rel (0) target = $region17
  $region16: #{bert_forward.25} parent=0 // pred_region
    _
  $region17: #{bert_forward.25} parent=0 // pred_fallthru
    _
  // Predicated region
  $region18: #{bert_forward.25} parent=0 // pred_check
    _
  $region19: #{bert_forward.25} parent=0 // pred_check_branch
    %89 = sbr.rel (0) target = $region21
  $region20: #{bert_forward.25} parent=0 // pred_region
    _
  $region21: #{bert_forward.25} parent=0 // pred_fallthru
    _

// kernel: bert_forward.26
$region0: #{bert_forward.26}
  #allocation0 [shape = 'u32[]', space=smem, size = 0x4, offset = 0x4, fixed_abs, tag = 'smem constant byte address 0x4 - core index']
  #allocation1 [shape = 'u32[144,128]{1,0:T(1,128)}', space=vmem, size = 0x12000, scoped, tag = 'internal scratch']
  %s0 = inlined_call_operand.vmem [shape: f32[8,32], index: 0, kind: input, shape index: {}]
  %s1 = inlined_call_operand.vmem [shape: bf16[32,2], index: 1, kind: input, shape index: {}]
  %s2 = inlined_call_operand.vmem [shape: f32[1,2], index: 2, kind: input, shape index: {}]
  %s3 = inlined_call_operand.vmem [shape: f32[8,2], index: 3, kind: output, shape index: {}]
  %s4 = sld [smem:[#allocation0]]
  $region22: #{bert_forward.26} parent=0
    _
  %s6 = ssub.s32 1, %s4
  %s7 = scalar_select 0, %s6, %s4
  // Predicated region
  $region2: #{bert_forward.26} parent=0 // pred_check
    _
  $region3: #{bert_forward.26} parent=0 // pred_check_branch
    %9 = sbr.rel (0) target = $region5
  $region4: #{bert_forward.26} parent=0 // pred_region
    _
  $region5: #{bert_forward.26} parent=0 // pred_fallthru
    _
  // Predicated region
  $region6: #{bert_forward.26} parent=0 // pred_check
    _
  $region7: #{bert_forward.26} parent=0 // pred_check_branch
    %11 = sbr.rel (0) target = $region9
  $region8: #{bert_forward.26} parent=0 // pred_region
    _
  $region9: #{bert_forward.26} parent=0 // pred_fallthru
    _
  // Predicated region
  $region10: #{bert_forward.26} parent=0 // pred_check
    _
  $region11: #{bert_forward.26} parent=0 // pred_check_branch
    %13 = sbr.rel (0) target = $region13
  $region12: #{bert_forward.26} parent=0 // pred_region
    _
  $region13: #{bert_forward.26} parent=0 // pred_fallthru
    _
  %v15 = vld [vmem:[%s0] sm:$0xff]
  %v16 = vpack.c.bf16 %v15, %v15
  %v17 = vld [vmem:[%s1] sm:$0xf]
  %v18 = vld [vmem:[%s1 + $0x4] sm:$0xf]
  %v19 = vld [vmem:[%s1 + $0x8] sm:$0xf]
  %v20 = vld [vmem:[%s1 + $0xc] sm:$0xf]
  %v21 = vld [vmem:[%s2] sm:$0x1]
  %v23 = vlaneseq
  %v24 = vshrl.u32 %v23, 7
  %v25 = vsub.s32 0, %v24
  %v26 = vrot.slane %v21, %v25
  %v32 = vunpack.c.l.b16 %v17
  %v33 = vunpack.c.l.b16 %v18
  %v34 = vunpack.c.l.b16 %v19
  %v35 = vunpack.c.l.b16 %v20
  %v36 = vpack.c.b16 %v33, %v32
  %v37 = vpack.c.b16 %v35, %v34
  %vm40 = vcmask 261120
  %v42 = vsel %vm40, %v16, 0
  %44 = vmatprep.subr.bf16.mxu0 0
  %45 = vmatpush1.bf16.msra.mxu0 0
  %46 = vmatprep.subr.bf16.mxu0 0
  %47 = vmatpush1.bf16.msra.mxu0 0
  %48 = vmatprep.subr.bf16.mxu0 0
  %49 = vmatpush1.bf16.msra.mxu0 0
  %50 = vmatprep.subr.bf16.mxu0 0
  %51 = vmatpush1.bf16.msra.mxu0 0
  %52 = vmatprep.subr.bf16.mxu0 0
  %53 = vmatpush1.bf16.msra.mxu0 0
  %54 = vmatprep.subr.bf16.mxu0 0
  %55 = vmatpush1.bf16.msra.mxu0 0
  %56 = vmatprep.subr.bf16.mxu0 0
  %57 = vmatpush1.bf16.msra.mxu0 %v37
  %58 = vmatprep.subr.bf16.mxu0 0
  %59 = vmatpush1.bf16.msra.mxu0 %v36
  %60 = vmatprep.subr.bf16.mxu0 0
  %61 = vmatpush2.bf16.msra.mxu0 0
  %62 = vmatprep.subr.bf16.mxu0 0
  %63 = vmatpush2.bf16.msra.mxu0 0
  %64 = vmatprep.subr.bf16.mxu0 0
  %65 = vmatpush2.bf16.msra.mxu0 0
  %66 = vmatprep.subr.bf16.mxu0 0
  %67 = vmatpush2.bf16.msra.mxu0 0
  %68 = vmatprep.subr.bf16.mxu0 0
  %69 = vmatpush2.bf16.msra.mxu0 0
  %70 = vmatprep.subr.bf16.mxu0 0
  %71 = vmatpush2.bf16.msra.mxu0 0
  %72 = vmatprep.subr.bf16.mxu0 0
  %73 = vmatpush2.bf16.msra.mxu0 0
  %74 = vmatprep.subr.bf16.mxu0 0
  %75 = vmatpush2.bf16.msra.mxu0 0
  %76 = vmatprep.mubr.bf16.mxu0 0
  %77 = vmatmul.mubr.bf16.gmra.mxu0 %v42
  %v78 = vpop.f32.mrf.mxu0
  %v79 = vadd.f32 %v26, %v78
  %v80 = vpop.f32.mrf.mxu0
  %v81 = vpop.f32.mrf.mxu0
  %v82 = vpop.f32.mrf.mxu0
  %83 = vdwg.mxu0
  %vm84 = vcmask 15360
  %85 = vst.msk [vmem:[%s3] sm:$0xff] %vm84, %v79
  // Predicated region
  $region14: #{bert_forward.26} parent=0 // pred_check
    _
  $region15: #{bert_forward.26} parent=0 // pred_check_branch
    %87 = sbr.rel (0) target = $region17
  $region16: #{bert_forward.26} parent=0 // pred_region
    _
  $region17: #{bert_forward.26} parent=0 // pred_fallthru
    _
  // Predicated region
  $region18: #{bert_forward.26} parent=0 // pred_check
    _
  $region19: #{bert_forward.26} parent=0 // pred_check_branch
    %89 = sbr.rel (0) target = $region21
  $region20: #{bert_forward.26} parent=0 // pred_region
    _
  $region21: #{bert_forward.26} parent=0 // pred_fallthru
    _

// kernel: bert_forward.27
$region0: #{bert_forward.27}
  #allocation0 [shape = 'u32[]', space=smem, size = 0x4, offset = 0x4, fixed_abs, tag = 'smem constant byte address 0x4 - core index']
  #allocation1 [shape = 'u32[144,128]{1,0:T(1,128)}', space=vmem, size = 0x12000, scoped, tag = 'internal scratch']
  %s0 = inlined_call_operand.vmem [shape: f32[2,2], index: 0, kind: input, shape index: {}]
  %s1 = inlined_call_operand.vmem [shape: s32[2], index: 1, kind: input, shape index: {}]
  %s2 = inlined_call_operand.hbm [shape: f32[1,1], index: 2, kind: output, shape index: {}]
  %s3 = sld [smem:[#allocation0]]
  $region22: #{bert_forward.27} parent=0
    _
  %s5 = ssub.s32 1, %s3
  %s6 = scalar_select 0, %s5, %s3
  $region1: #{bert_forward.27} parent=0
    #allocation2 [shape = 'u8[512]{0}', space=smem, size = 0x200, scoped, tag = 'input window, operand 1, single buffered']
    #allocation3 [shape = 's32[1]{0}', space=sflag, size = 0x4, scoped, tag = 'scoped memory for bert_forward.27']
    #allocation4 [shape = 's32[1]{0}', space=sflag, size = 0x4, scoped, tag = 'scoped memory for bert_forward.27']
    #allocation5 [shape = 'u8[512]{0}', space=vmem, size = 0x400, scoped, tag = 'output window, operand 0, single buffered']
    %7 = vsyncpa [#allocation4], 0
    %8 = vsyncpa [#allocation3], 0
    // Predicated region
    $region2: #{bert_forward.27} parent=1 // pred_check
      _
    $region3: #{bert_forward.27} parent=1 // pred_check_branch
      %10 = sbr.rel (0) target = $region5
    $region4: #{bert_forward.27} parent=1 // pred_region
      _
    $region5: #{bert_forward.27} parent=1 // pred_fallthru
      _
    // Predicated region
    $region6: #{bert_forward.27} parent=1 // pred_check
      _
    $region7: #{bert_forward.27} parent=1 // pred_check_branch
      %12 = sbr.rel (0) target = $region9
    $region8: #{bert_forward.27} parent=1 // pred_region
      %s14 = ssub.s32 16, 16
      %15 = vsyncadd [#allocation4], %s14
      %s17 = sshll.u32 %s1, 4
      %s18 = int_to_ptr.vmem [resolvable:$true] %s17
      %20 = dma.vmem_to_smem %s18, 16, [#allocation2], [#allocation4]
    $region9: #{bert_forward.27} parent=1 // pred_fallthru
      _
    // Predicated region
    $region10: #{bert_forward.27} parent=1 // pred_check
      _
    $region11: #{bert_forward.27} parent=1 // pred_check_branch
      %22 = sbr.rel (0) target = $region13
    $region12: #{bert_forward.27} parent=1 // pred_region
      %23 = dma.done [#allocation4], 16
    $region13: #{bert_forward.27} parent=1 // pred_fallthru
      _
    %24 = sfence
    %v25 = vld [vmem:[%s0] sm:$0x3]
    %vm26 = vcmask 9216
    %v27 = vsel %vm26, %v25, -inf
    %28 = vmax.xlane.f32.xlu0 %v27
    %v29 = vpop.xlane.xlu0 %28
    %v30 = vsub.f32 %v25, %v29
    %v31 = vmul.f32 %v30, 1.442695
    %v32 = vpow.pop %v31
    %v33 = vsel %vm26, %v32, 0.0
    %34 = vadd.xlane.f32.xlu0 %v33
    %v35 = vpop.xlane.xlu0 %34
    %v36 = vlog2.pop %v35
    %v37 = vmul.f32 %v36, 0.6931472
    %v38 = vadd.f32 %v37, %v29
    %v39 = vlaneseq
    %v40 = vand.u32 %v39, 127
    %s41 = sld [smem:[#allocation2]]
    %v42 = vstv %s41
    %vm43 = vcmp.eq.s32.totalorder %v40, %v42
    %v44 = vsel %vm43, 1, 0
    %v45 = vcvt.s32.f32 %v44
    %v46 = vsub.f32 %v38, %v25
    %v47 = vmul.f32 %v46, %v45
    %vm48 = vcmask 8192
    %v49 = vsel %vm48, %v47, 0.0
    %50 = vadd.xlane.f32.xlu0 %v49
    %v51 = vpop.xlane.xlu0 %50
    %v52 = vrot.slane %v51, 4
    %v53 = vadd.f32 %v51, %v52
    %v54 = vrot.slane %v53, 2
    %v55 = vadd.f32 %v53, %v54
    %v56 = vrot.slane %v55, 1
    %v57 = vadd.f32 %v55, %v56
    %s58 = vtos %v57
    %s59 = sadd.f32 %s58, 0.0
    %s60 = sld [smem:[#allocation2 + $0x1]]
    %v61 = vstv %s60
    %vm62 = vcmp.eq.s32.totalorder %v40, %v61
    %v63 = vsel %vm62, 1, 0
    %v64 = vcvt.s32.f32 %v63
    %v65 = vmul.f32 %v46, %v64
    %v67 = vrot.slane %v65, 1
    %v69 = vsel %vm48, %v67, 0.0
    %70 = vadd.xlane.f32.xlu0 %v69
    %v71 = vpop.xlane.xlu0 %70
    %v72 = vrot.slane %v71, 4
    %v73 = vadd.f32 %v71, %v72
    %v74 = vrot.slane %v73, 2
    %v75 = vadd.f32 %v73, %v74
    %v76 = vrot.slane %v75, 1
    %v77 = vadd.f32 %v75, %v76
    %s78 = vtos %v77
    %s79 = sadd.f32 %s59, %s78
    %v80 = vrcp.pop 2.0
    %s81 = vtos %v80
    %s82 = smul.f32 %s79, %s81
    %v83 = vstv %s82
    %vm84 = vcmask 0
    %85 = vst.msk [vmem:[#allocation5] sm:$0x1] %vm84, %v83
    // Predicated region
    $region14: #{bert_forward.27} parent=1 // pred_check
      _
    $region15: #{bert_forward.27} parent=1 // pred_check_branch
      %87 = sbr.rel (0) target = $region17
    $region16: #{bert_forward.27} parent=1 // pred_region
      %s89 = ssub.s32 16, 16
      %90 = vsyncadd [#allocation3], %s89
      %s92 = sshll.u32 [#allocation5], 4
      %s93 = int_to_ptr.vmem [resolvable:$true] %s92
      %95 = dma.vmem_to_hbm [thread:$0]  %s93, 16, %s2, [#allocation3]
    $region17: #{bert_forward.27} parent=1 // pred_fallthru
      _
    // Predicated region
    $region18: #{bert_forward.27} parent=1 // pred_check
      _
    $region19: #{bert_forward.27} parent=1 // pred_check_branch
      %97 = sbr.rel (0) target = $region21
    $region20: #{bert_forward.27} parent=1 // pred_region
      %98 = dma.done [#allocation3], 16
    $region21: #{bert_forward.27} parent=1 // pred_fallthru
      _
    %99 = vsyncpa [#allocation3], 1
    %100 = vsyncpa [#allocation4], 1

</llo_original>
